<compile_context>
chip_gen: v5e
topology: v5e:2x2
jax: 0.10.0
libtpu: 0.0.40
codegen_flags: <defaults>
</compile_context>

<pallas_src>
import jax
import jax.numpy as jnp
import numpy as np
from jax.experimental import pallas as pl
from jax.experimental.pallas import tpu as pltpu

# ---- small, TPU-friendly problem sizes (consistent with the module's forward) ----
B = 2           # batch
VOCAB = 32      # vocab_size
E = 32          # embedding_dim
L = 36          # MAX_SEQUENCE_LENGTH
K = 5           # conv kernel_size (stride=1)
C = 128         # channel_size
D_A = 32        # d_a
R = 8           # r (attention hops)
S = 4           # class_size
L_OUT = L - K + 1            # 32 (Conv1d, stride 1, no padding); multiple of 8
BL = B * L_OUT               # 64 conv-output rows (both batches stacked)
BL_TOK = B * L               # 72 token rows
OUT_ROWS = 8                 # lane/sublane-dense output slab
OUT_LANES = 128


def fwd_kernel(tok_ref, emb_ref, cw_ref, w1_ref, w2_ref, wfc_ref,
               psel_ref, sel_ref, bias_ref, o_ref):
    """Entire forward (both batch rows) in one grid-less invocation.

    tok_ref : (B*L, 1)      int32  token ids, batch-major
    emb_ref : (VOCAB, E)    bf16   embedding table (row 0 == 0 -> padding_idx=0)
    cw_ref  : (K*E, C)      bf16   conv1 weight, tap-major: cw[k*E+e, c]
    w1_ref  : (C, D_A)      bf16   linear_first.weight^T
    w2_ref  : (D_A, R)      bf16   linear_second.weight^T
    wfc_ref : (C, S*R)      bf16   fc weight: wfc[c, s*R+r] = fc.W[s, r*C+c]
    psel_ref: (B, B*L_OUT)  f32    0/1 per-batch row-block indicator
    sel_ref : (S*R, 128)    f32    0/1 hop->class group-sum matrix (lane-padded)
    bias_ref: (4, 128)      f32    rows: [conv_b ; b1 ; b2 ; fc_b] (lane-padded)
    o_ref   : (8, 128)      f32    lane-dense output slab; logits in [:B, :S]
    """
    # ---- packed biases (f32) ----
    cb = bias_ref[0:1, :]                      # (1, C)  -- C == 128
    b1 = bias_ref[1:2, :D_A]                   # (1, D_A)
    b2 = bias_ref[2:3, :R]                     # (1, R)
    fcb = bias_ref[3:4, :]                     # (1, 128), zero beyond S

    emb = emb_ref[...]                         # (VOCAB, E) bf16

    # ---- fused embedding lookup + Conv1d (+bias) + ReLU -----------------------
    # gather == one-hot matmul; conv == K accumulated tap matmuls reading shifted
    # token windows straight from the VMEM token ref (no HBM im2col).
    col_ids = jax.lax.broadcasted_iota(jnp.int32, (BL, VOCAB), 1)
    conv = jnp.zeros((BL, C), jnp.float32)
    for k in range(K):                                      # static unroll, K = 5
        tk = jnp.concatenate(
            [tok_ref[pl.ds(b * L + k, L_OUT), :] for b in range(B)], axis=0)   # (BL, 1)
        onehot = jnp.where(tk == col_ids, 1.0, 0.0).astype(jnp.bfloat16)       # (BL, VOCAB)
        xk = jnp.dot(onehot, emb, preferred_element_type=jnp.float32)          # (BL, E)
        conv += jnp.dot(xk.astype(jnp.bfloat16), cw_ref[pl.ds(k * E, E), :],
                        preferred_element_type=jnp.float32)                    # (BL, C)
    conv = jnp.maximum(conv + cb, 0.0)                       # ReLU, f32
    conv_bf = conv.astype(jnp.bfloat16)

    # ---- structured self-attention scores (bf16 MXU, f32 accumulation) --------
    h1 = jnp.tanh(jnp.dot(conv_bf, w1_ref[...],
                          preferred_element_type=jnp.float32) + b1)            # (BL, D_A)
    h2 = jnp.dot(h1.astype(jnp.bfloat16), w2_ref[...],
                 preferred_element_type=jnp.float32) + b2                      # (BL, R)

    # fc weight pre-applied to conv features: g[row, s*R+r] = conv[row,:] @ fc.W[s, r*C:(r+1)*C]
    g = jnp.dot(conv_bf, wfc_ref[...], preferred_element_type=jnp.float32)     # (BL, S*R)

    # ---- softmax over the sequence axis, both batches at once (f32) -----------
    # A per-hop max over ALL rows is a valid shift (softmax is shift-invariant
    # within each normalization group); keeps a single XLU reduction.
    m = jnp.max(h2, axis=0, keepdims=True)                   # (1, R)
    e = jnp.exp(h2 - m)                                      # (BL, R), EUP
    e_rep = jnp.concatenate([e] * S, axis=1)                 # (BL, S*R): e_rep[:, s*R+r] = e[:, r]

    # per-batch sums as tiny 0/1 MXU matmuls instead of per-batch Python loops
    psel = psel_ref[...]                                                       # (B, BL)
    numer = jnp.dot(psel, e_rep * g, preferred_element_type=jnp.float32)       # (B, S*R)
    denom = jnp.dot(psel, e, preferred_element_type=jnp.float32)               # (B, R)
    # exact division (approx reciprocal caused the previous tolerance failure)
    rows = numer / jnp.concatenate([denom] * S, axis=1)                        # (B, S*R)

    # ---- group-sum over r + fc bias, stored as one lane-dense (8,128) vreg ----
    rows8 = jnp.concatenate(
        [rows, jnp.zeros((OUT_ROWS - B, S * R), jnp.float32)], axis=0)         # (8, S*R)
    logits = jnp.dot(rows8, sel_ref[...],
                     preferred_element_type=jnp.float32) + fcb                 # (8, 128)
    o_ref[...] = logits                                                        # full-tile store


def _cost_estimate():
    flops = 2 * (K * BL * VOCAB * E            # one-hot gathers
                 + K * BL * E * C              # conv taps
                 + BL * C * D_A                # linear_first
                 + BL * D_A * R                # linear_second
                 + BL * C * S * R              # fc pre-applied to conv
                 + B * BL * S * R + B * BL * R  # per-batch sums
                 + OUT_ROWS * S * R * OUT_LANES)
    transcendentals = BL * D_A + BL * R         # tanh + exp
    bytes_accessed = (4 * BL_TOK
                      + 2 * (VOCAB * E + K * E * C + C * D_A + D_A * R + C * S * R)
                      + 4 * (B * BL + S * R * OUT_LANES + 4 * OUT_LANES)
                      + 4 * OUT_ROWS * OUT_LANES)
    return pl.CostEstimate(flops=flops, transcendentals=transcendentals,
                           bytes_accessed=bytes_accessed)


@jax.jit
def embedding_cnn_attention(tokens, packed):
    """Hot path: one tiny reshape of the token ids + a single pallas_call."""
    emb, cw, w1, w2, wfc, psel, sel, bias = packed
    tok = tokens.reshape(BL_TOK, 1).astype(jnp.int32)
    out = pl.pallas_call(
        fwd_kernel,
        out_shape=jax.ShapeDtypeStruct((OUT_ROWS, OUT_LANES), jnp.float32),
        in_specs=[pl.BlockSpec(memory_space=pltpu.MemorySpace.VMEM)] * 9,
        out_specs=pl.BlockSpec(memory_space=pltpu.MemorySpace.VMEM),
        cost_estimate=_cost_estimate(),
    )(tok, emb, cw, w1, w2, wfc, psel, sel, bias)
    return out[:B, :S]


def pack_params(emb, conv_w, conv_b, w1, b1, w2, b2, fcw3, fcb):
    """One-time weight formatting into kernel layouts (outside the hot path)."""
    cw = conv_w.reshape(K * E, C).astype(jnp.bfloat16)                 # (K*E, C)
    wfc = jnp.transpose(fcw3, (1, 2, 0)).reshape(C, S * R).astype(jnp.bfloat16)
    # trace-time 0/1 selection constants (hoisted out of the kernel epilogue)
    psel = np.zeros((B, BL), np.float32)
    for b in range(B):
        psel[b, b * L_OUT:(b + 1) * L_OUT] = 1.0
    sel = np.zeros((S * R, OUT_LANES), np.float32)
    for s_ in range(S):
        sel[s_ * R:(s_ + 1) * R, s_] = 1.0
    # all bias vectors packed into a single lane-padded operand
    bias = jnp.zeros((4, OUT_LANES), jnp.float32)
    bias = bias.at[0, :C].set(conv_b[0])
    bias = bias.at[1, :D_A].set(b1[0])
    bias = bias.at[2, :R].set(b2[0])
    bias = bias.at[3, :S].set(fcb[0])
    return (emb.astype(jnp.bfloat16), cw, w1.astype(jnp.bfloat16),
            w2.astype(jnp.bfloat16), wfc, jnp.asarray(psel), jnp.asarray(sel), bias)


def make_params(key):
    ks = jax.random.split(key, 8)
    emb = 0.1 * jax.random.normal(ks[0], (VOCAB, E), jnp.float32)
    emb = emb.at[0].set(0.0)                                      # padding_idx=0
    conv_w = 0.1 * jax.random.normal(ks[1], (K, E, C), jnp.float32)
    conv_b = 0.1 * jax.random.normal(ks[2], (1, C), jnp.float32)
    w1 = 0.1 * jax.random.normal(ks[3], (C, D_A), jnp.float32)    # linear_first.weight^T
    b1 = jnp.zeros((1, D_A), jnp.float32)                         # bias filled with 0
    w2 = 0.1 * jax.random.normal(ks[4], (D_A, R), jnp.float32)    # linear_second.weight^T
    b2 = jnp.zeros((1, R), jnp.float32)                           # bias filled with 0
    # fc.weight is (S, R*C) in PyTorch; stored here as (R, C, S): fcw3[r,c,s] = fc.W[s, r*C+c]
    fcw3 = 0.1 * jax.random.normal(ks[5], (R, C, S), jnp.float32)
    fcb = 0.1 * jax.random.normal(ks[6], (1, S), jnp.float32)
    return emb, conv_w, conv_b, w1, b1, w2, b2, fcw3, fcb


def reference_forward(tokens, emb, conv_w, conv_b, w1, b1, w2, b2, fcw3, fcb):
    """Pure-JAX f32 reference of the PyTorch module's forward (eval mode)."""
    x = emb[tokens]                                               # (B, L, E)
    conv = jnp.zeros((B, L_OUT, C), jnp.float32)
    for k in range(K):
        conv = conv + jnp.einsum('ble,ec->blc', x[:, k:k + L_OUT, :], conv_w[k])
    conv = jax.nn.relu(conv + conv_b)                             # (B, L_OUT, C)
    h1 = jnp.tanh(conv @ w1 + b1)
    h2 = h1 @ w2 + b2                                             # (B, L_OUT, R)
    att = jax.nn.softmax(h2, axis=1)                              # softmax over seq axis
    sent = jnp.einsum('blr,blc->brc', att, conv)                  # (B, R, C)
    flat = sent.reshape(B, R * C)
    return flat @ fcw3.reshape(R * C, S) + fcb


if __name__ == "__main__":
    key = jax.random.PRNGKey(0)
    k_tok, k_par = jax.random.split(key)
    tokens = jax.random.randint(k_tok, (B, L), 0, VOCAB, dtype=jnp.int32)
    params = make_params(k_par)
    packed = pack_params(*params)

    out = jax.block_until_ready(embedding_cnn_attention(tokens, packed))
    ref = reference_forward(tokens, *params)

    # Tolerance sized for bfloat16 MXU operands (f32 accumulation, f32 transcendentals):
    # ~2^-9 relative per operand accumulating through conv -> attention -> fc gives
    # O(1e-3) absolute logit error; a real layout/permutation bug would show as
    # O(0.1+) absolute error, far above this bound.
    np.testing.assert_allclose(np.asarray(out), np.asarray(ref), rtol=5e-2, atol=5e-3)

    print("KERNEL_OK")
</pallas_src>

<mosaic_0001>
module attributes {stable_mosaic.version = 11 : i64} {
  func.func @fwd_kernel(%arg0: memref<72x1xi32, #tpu.memory_space<vmem>>, %arg1: memref<32x32xbf16, #tpu.memory_space<vmem>>, %arg2: memref<160x128xbf16, #tpu.memory_space<vmem>>, %arg3: memref<128x32xbf16, #tpu.memory_space<vmem>>, %arg4: memref<32x8xbf16, #tpu.memory_space<vmem>>, %arg5: memref<128x32xbf16, #tpu.memory_space<vmem>>, %arg6: memref<2x64xf32, #tpu.memory_space<vmem>>, %arg7: memref<32x128xf32, #tpu.memory_space<vmem>>, %arg8: memref<4x128xf32, #tpu.memory_space<vmem>>, %arg9: memref<8x128xf32, #tpu.memory_space<vmem>>) attributes {dimension_semantics = [], scalar_prefetch = 0 : i64, scratch_operands = 0 : i64, tpu.core_type = #tpu.core_type<tc>} {
    %c0 = arith.constant 0 : index
    %c0_0 = arith.constant 0 : index
    %0 = vector.load %arg8[%c0, %c0_0] : memref<4x128xf32, #tpu.memory_space<vmem>>, vector<1x128xf32>
    %c1 = arith.constant 1 : index
    %c0_1 = arith.constant 0 : index
    %1 = vector.load %arg8[%c1, %c0_1] : memref<4x128xf32, #tpu.memory_space<vmem>>, vector<1x32xf32>
    %c2 = arith.constant 2 : index
    %c0_2 = arith.constant 0 : index
    %2 = vector.load %arg8[%c2, %c0_2] : memref<4x128xf32, #tpu.memory_space<vmem>>, vector<1x8xf32>
    %c3 = arith.constant 3 : index
    %c0_3 = arith.constant 0 : index
    %3 = vector.load %arg8[%c3, %c0_3] : memref<4x128xf32, #tpu.memory_space<vmem>>, vector<1x128xf32>
    %c0_4 = arith.constant 0 : index
    %c0_5 = arith.constant 0 : index
    %4 = vector.load %arg1[%c0_4, %c0_5] : memref<32x32xbf16, #tpu.memory_space<vmem>>, vector<32x32xbf16>
    %5 = tpu.iota {dimensions = array<i32: 1>} : vector<64x32xi32>
    %cst = arith.constant 0.000000e+00 : f32
    %6 = vector.broadcast %cst : f32 to vector<64x128xf32>
    %c0_6 = arith.constant 0 : index
    %c0_7 = arith.constant 0 : index
    %7 = vector.load %arg0[%c0_6, %c0_7] : memref<72x1xi32, #tpu.memory_space<vmem>>, vector<32x1xi32>
    %c36 = arith.constant 36 : index
    %c0_8 = arith.constant 0 : index
    %8 = vector.load %arg0[%c36, %c0_8] : memref<72x1xi32, #tpu.memory_space<vmem>>, vector<32x1xi32>
    %9 = tpu.concatenate %7, %8 in 0 : vector<32x1xi32>, vector<32x1xi32> -> vector<64x1xi32>
    %10 = vector.broadcast %9 : vector<64x1xi32> to vector<64x32xi32>
    %11 = arith.cmpi eq, %10, %5 : vector<64x32xi32>
    %cst_9 = arith.constant 1.000000e+00 : f32
    %cst_10 = arith.constant 0.000000e+00 : f32
    %12 = vector.broadcast %cst_9 : f32 to vector<64x32xf32>
    %13 = vector.broadcast %cst_10 : f32 to vector<64x32xf32>
    %14 = arith.select %11, %12, %13 : vector<64x32xi1>, vector<64x32xf32>
    %15 = arith.truncf %14 : vector<64x32xf32> to vector<64x32xbf16>
    %cst_11 = arith.constant dense<0.000000e+00> : vector<64x32xf32>
    %16 = tpu.matmul %15, %4, %cst_11 {dimension_numbers = #tpu.dot_dimension_numbers<[1], [0], [0], [1], [0, 0, 1, 1], [], []>} : vector<64x32xbf16>, vector<32x32xbf16>, vector<64x32xf32> -> vector<64x32xf32>
    %17 = arith.truncf %16 : vector<64x32xf32> to vector<64x32xbf16>
    %c0_12 = arith.constant 0 : index
    %c0_13 = arith.constant 0 : index
    %18 = vector.load %arg2[%c0_12, %c0_13] : memref<160x128xbf16, #tpu.memory_space<vmem>>, vector<32x128xbf16>
    %cst_14 = arith.constant dense<0.000000e+00> : vector<64x128xf32>
    %19 = tpu.matmul %17, %18, %cst_14 {dimension_numbers = #tpu.dot_dimension_numbers<[1], [0], [0], [1], [0, 0, 1, 1], [], []>} : vector<64x32xbf16>, vector<32x128xbf16>, vector<64x128xf32> -> vector<64x128xf32>
    %20 = arith.addf %6, %19 : vector<64x128xf32>
    %c1_15 = arith.constant 1 : index
    %c0_16 = arith.constant 0 : index
    %21 = vector.load %arg0[%c1_15, %c0_16] : memref<72x1xi32, #tpu.memory_space<vmem>>, vector<32x1xi32>
    %c37 = arith.constant 37 : index
    %c0_17 = arith.constant 0 : index
    %22 = vector.load %arg0[%c37, %c0_17] : memref<72x1xi32, #tpu.memory_space<vmem>>, vector<32x1xi32>
    %23 = tpu.concatenate %21, %22 in 0 : vector<32x1xi32>, vector<32x1xi32> -> vector<64x1xi32>
    %24 = vector.broadcast %23 : vector<64x1xi32> to vector<64x32xi32>
    %25 = arith.cmpi eq, %24, %5 : vector<64x32xi32>
    %cst_18 = arith.constant 1.000000e+00 : f32
    %cst_19 = arith.constant 0.000000e+00 : f32
    %26 = vector.broadcast %cst_18 : f32 to vector<64x32xf32>
    %27 = vector.broadcast %cst_19 : f32 to vector<64x32xf32>
    %28 = arith.select %25, %26, %27 : vector<64x32xi1>, vector<64x32xf32>
    %29 = arith.truncf %28 : vector<64x32xf32> to vector<64x32xbf16>
    %cst_20 = arith.constant dense<0.000000e+00> : vector<64x32xf32>
    %30 = tpu.matmul %29, %4, %cst_20 {dimension_numbers = #tpu.dot_dimension_numbers<[1], [0], [0], [1], [0, 0, 1, 1], [], []>} : vector<64x32xbf16>, vector<32x32xbf16>, vector<64x32xf32> -> vector<64x32xf32>
    %31 = arith.truncf %30 : vector<64x32xf32> to vector<64x32xbf16>
    %c32 = arith.constant 32 : index
    %c0_21 = arith.constant 0 : index
    %32 = vector.load %arg2[%c32, %c0_21] : memref<160x128xbf16, #tpu.memory_space<vmem>>, vector<32x128xbf16>
    %cst_22 = arith.constant dense<0.000000e+00> : vector<64x128xf32>
    %33 = tpu.matmul %31, %32, %cst_22 {dimension_numbers = #tpu.dot_dimension_numbers<[1], [0], [0], [1], [0, 0, 1, 1], [], []>} : vector<64x32xbf16>, vector<32x128xbf16>, vector<64x128xf32> -> vector<64x128xf32>
    %34 = arith.addf %20, %33 : vector<64x128xf32>
    %c2_23 = arith.constant 2 : index
    %c0_24 = arith.constant 0 : index
    %35 = vector.load %arg0[%c2_23, %c0_24] : memref<72x1xi32, #tpu.memory_space<vmem>>, vector<32x1xi32>
    %c38 = arith.constant 38 : index
    %c0_25 = arith.constant 0 : index
    %36 = vector.load %arg0[%c38, %c0_25] : memref<72x1xi32, #tpu.memory_space<vmem>>, vector<32x1xi32>
    %37 = tpu.concatenate %35, %36 in 0 : vector<32x1xi32>, vector<32x1xi32> -> vector<64x1xi32>
    %38 = vector.broadcast %37 : vector<64x1xi32> to vector<64x32xi32>
    %39 = arith.cmpi eq, %38, %5 : vector<64x32xi32>
    %cst_26 = arith.constant 1.000000e+00 : f32
    %cst_27 = arith.constant 0.000000e+00 : f32
    %40 = vector.broadcast %cst_26 : f32 to vector<64x32xf32>
    %41 = vector.broadcast %cst_27 : f32 to vector<64x32xf32>
    %42 = arith.select %39, %40, %41 : vector<64x32xi1>, vector<64x32xf32>
    %43 = arith.truncf %42 : vector<64x32xf32> to vector<64x32xbf16>
    %cst_28 = arith.constant dense<0.000000e+00> : vector<64x32xf32>
    %44 = tpu.matmul %43, %4, %cst_28 {dimension_numbers = #tpu.dot_dimension_numbers<[1], [0], [0], [1], [0, 0, 1, 1], [], []>} : vector<64x32xbf16>, vector<32x32xbf16>, vector<64x32xf32> -> vector<64x32xf32>
    %45 = arith.truncf %44 : vector<64x32xf32> to vector<64x32xbf16>
    %c64 = arith.constant 64 : index
    %c0_29 = arith.constant 0 : index
    %46 = vector.load %arg2[%c64, %c0_29] : memref<160x128xbf16, #tpu.memory_space<vmem>>, vector<32x128xbf16>
    %cst_30 = arith.constant dense<0.000000e+00> : vector<64x128xf32>
    %47 = tpu.matmul %45, %46, %cst_30 {dimension_numbers = #tpu.dot_dimension_numbers<[1], [0], [0], [1], [0, 0, 1, 1], [], []>} : vector<64x32xbf16>, vector<32x128xbf16>, vector<64x128xf32> -> vector<64x128xf32>
    %48 = arith.addf %34, %47 : vector<64x128xf32>
    %c3_31 = arith.constant 3 : index
    %c0_32 = arith.constant 0 : index
    %49 = vector.load %arg0[%c3_31, %c0_32] : memref<72x1xi32, #tpu.memory_space<vmem>>, vector<32x1xi32>
    %c39 = arith.constant 39 : index
    %c0_33 = arith.constant 0 : index
    %50 = vector.load %arg0[%c39, %c0_33] : memref<72x1xi32, #tpu.memory_space<vmem>>, vector<32x1xi32>
    %51 = tpu.concatenate %49, %50 in 0 : vector<32x1xi32>, vector<32x1xi32> -> vector<64x1xi32>
    %52 = vector.broadcast %51 : vector<64x1xi32> to vector<64x32xi32>
    %53 = arith.cmpi eq, %52, %5 : vector<64x32xi32>
    %cst_34 = arith.constant 1.000000e+00 : f32
    %cst_35 = arith.constant 0.000000e+00 : f32
    %54 = vector.broadcast %cst_34 : f32 to vector<64x32xf32>
    %55 = vector.broadcast %cst_35 : f32 to vector<64x32xf32>
    %56 = arith.select %53, %54, %55 : vector<64x32xi1>, vector<64x32xf32>
    %57 = arith.truncf %56 : vector<64x32xf32> to vector<64x32xbf16>
    %cst_36 = arith.constant dense<0.000000e+00> : vector<64x32xf32>
    %58 = tpu.matmul %57, %4, %cst_36 {dimension_numbers = #tpu.dot_dimension_numbers<[1], [0], [0], [1], [0, 0, 1, 1], [], []>} : vector<64x32xbf16>, vector<32x32xbf16>, vector<64x32xf32> -> vector<64x32xf32>
    %59 = arith.truncf %58 : vector<64x32xf32> to vector<64x32xbf16>
    %c96 = arith.constant 96 : index
    %c0_37 = arith.constant 0 : index
    %60 = vector.load %arg2[%c96, %c0_37] : memref<160x128xbf16, #tpu.memory_space<vmem>>, vector<32x128xbf16>
    %cst_38 = arith.constant dense<0.000000e+00> : vector<64x128xf32>
    %61 = tpu.matmul %59, %60, %cst_38 {dimension_numbers = #tpu.dot_dimension_numbers<[1], [0], [0], [1], [0, 0, 1, 1], [], []>} : vector<64x32xbf16>, vector<32x128xbf16>, vector<64x128xf32> -> vector<64x128xf32>
    %62 = arith.addf %48, %61 : vector<64x128xf32>
    %c4 = arith.constant 4 : index
    %c0_39 = arith.constant 0 : index
    %63 = vector.load %arg0[%c4, %c0_39] : memref<72x1xi32, #tpu.memory_space<vmem>>, vector<32x1xi32>
    %c40 = arith.constant 40 : index
    %c0_40 = arith.constant 0 : index
    %64 = vector.load %arg0[%c40, %c0_40] : memref<72x1xi32, #tpu.memory_space<vmem>>, vector<32x1xi32>
    %65 = tpu.concatenate %63, %64 in 0 : vector<32x1xi32>, vector<32x1xi32> -> vector<64x1xi32>
    %66 = vector.broadcast %65 : vector<64x1xi32> to vector<64x32xi32>
    %67 = arith.cmpi eq, %66, %5 : vector<64x32xi32>
    %cst_41 = arith.constant 1.000000e+00 : f32
    %cst_42 = arith.constant 0.000000e+00 : f32
    %68 = vector.broadcast %cst_41 : f32 to vector<64x32xf32>
    %69 = vector.broadcast %cst_42 : f32 to vector<64x32xf32>
    %70 = arith.select %67, %68, %69 : vector<64x32xi1>, vector<64x32xf32>
    %71 = arith.truncf %70 : vector<64x32xf32> to vector<64x32xbf16>
    %cst_43 = arith.constant dense<0.000000e+00> : vector<64x32xf32>
    %72 = tpu.matmul %71, %4, %cst_43 {dimension_numbers = #tpu.dot_dimension_numbers<[1], [0], [0], [1], [0, 0, 1, 1], [], []>} : vector<64x32xbf16>, vector<32x32xbf16>, vector<64x32xf32> -> vector<64x32xf32>
    %73 = arith.truncf %72 : vector<64x32xf32> to vector<64x32xbf16>
    %c128 = arith.constant 128 : index
    %c0_44 = arith.constant 0 : index
    %74 = vector.load %arg2[%c128, %c0_44] : memref<160x128xbf16, #tpu.memory_space<vmem>>, vector<32x128xbf16>
    %cst_45 = arith.constant dense<0.000000e+00> : vector<64x128xf32>
    %75 = tpu.matmul %73, %74, %cst_45 {dimension_numbers = #tpu.dot_dimension_numbers<[1], [0], [0], [1], [0, 0, 1, 1], [], []>} : vector<64x32xbf16>, vector<32x128xbf16>, vector<64x128xf32> -> vector<64x128xf32>
    %76 = arith.addf %62, %75 : vector<64x128xf32>
    %77 = vector.broadcast %0 : vector<1x128xf32> to vector<64x128xf32>
    %78 = arith.addf %76, %77 : vector<64x128xf32>
    %cst_46 = arith.constant 0.000000e+00 : f32
    %79 = vector.broadcast %cst_46 : f32 to vector<64x128xf32>
    %80 = arith.maximumf %78, %79 : vector<64x128xf32>
    %81 = arith.truncf %80 : vector<64x128xf32> to vector<64x128xbf16>
    %c0_47 = arith.constant 0 : index
    %c0_48 = arith.constant 0 : index
    %82 = vector.load %arg3[%c0_47, %c0_48] : memref<128x32xbf16, #tpu.memory_space<vmem>>, vector<128x32xbf16>
    %cst_49 = arith.constant dense<0.000000e+00> : vector<64x32xf32>
    %83 = tpu.matmul %81, %82, %cst_49 {dimension_numbers = #tpu.dot_dimension_numbers<[1], [0], [0], [1], [0, 0, 1, 1], [], []>} : vector<64x128xbf16>, vector<128x32xbf16>, vector<64x32xf32> -> vector<64x32xf32>
    %84 = vector.broadcast %1 : vector<1x32xf32> to vector<64x32xf32>
    %85 = arith.addf %83, %84 : vector<64x32xf32>
    %86 = math.tanh %85 : vector<64x32xf32>
    %87 = arith.truncf %86 : vector<64x32xf32> to vector<64x32xbf16>
    %c0_50 = arith.constant 0 : index
    %c0_51 = arith.constant 0 : index
    %88 = vector.load %arg4[%c0_50, %c0_51] : memref<32x8xbf16, #tpu.memory_space<vmem>>, vector<32x8xbf16>
    %cst_52 = arith.constant dense<0.000000e+00> : vector<64x8xf32>
    %89 = tpu.matmul %87, %88, %cst_52 {dimension_numbers = #tpu.dot_dimension_numbers<[1], [0], [0], [1], [0, 0, 1, 1], [], []>} : vector<64x32xbf16>, vector<32x8xbf16>, vector<64x8xf32> -> vector<64x8xf32>
    %90 = vector.broadcast %2 : vector<1x8xf32> to vector<64x8xf32>
    %91 = arith.addf %89, %90 : vector<64x8xf32>
    %c0_53 = arith.constant 0 : index
    %c0_54 = arith.constant 0 : index
    %92 = vector.load %arg5[%c0_53, %c0_54] : memref<128x32xbf16, #tpu.memory_space<vmem>>, vector<128x32xbf16>
    %cst_55 = arith.constant dense<0.000000e+00> : vector<64x32xf32>
    %93 = tpu.matmul %81, %92, %cst_55 {dimension_numbers = #tpu.dot_dimension_numbers<[1], [0], [0], [1], [0, 0, 1, 1], [], []>} : vector<64x128xbf16>, vector<128x32xbf16>, vector<64x32xf32> -> vector<64x32xf32>
    %cst_56 = arith.constant dense<0xFF800000> : vector<8xf32>
    %94 = vector.multi_reduction <maximumf>, %91, %cst_56 [0] : vector<64x8xf32> to vector<8xf32>
    %95 = vector.shape_cast %94 : vector<8xf32> to vector<1x8xf32>
    %96 = vector.broadcast %95 : vector<1x8xf32> to vector<64x8xf32>
    %97 = arith.subf %91, %96 : vector<64x8xf32>
    %98 = math.exp %97 : vector<64x8xf32>
    %99 = tpu.concatenate %98, %98, %98, %98 in 1 : vector<64x8xf32>, vector<64x8xf32>, vector<64x8xf32>, vector<64x8xf32> -> vector<64x32xf32>
    %c0_57 = arith.constant 0 : index
    %c0_58 = arith.constant 0 : index
    %100 = vector.load %arg6[%c0_57, %c0_58] : memref<2x64xf32, #tpu.memory_space<vmem>>, vector<2x64xf32>
    %101 = arith.mulf %99, %93 : vector<64x32xf32>
    %cst_59 = arith.constant dense<0.000000e+00> : vector<2x32xf32>
    %102 = tpu.matmul %100, %101, %cst_59 {dimension_numbers = #tpu.dot_dimension_numbers<[1], [0], [0], [1], [0, 0, 1, 1], [], []>} : vector<2x64xf32>, vector<64x32xf32>, vector<2x32xf32> -> vector<2x32xf32>
    %cst_60 = arith.constant dense<0.000000e+00> : vector<2x8xf32>
    %103 = tpu.matmul %100, %98, %cst_60 {dimension_numbers = #tpu.dot_dimension_numbers<[1], [0], [0], [1], [0, 0, 1, 1], [], []>} : vector<2x64xf32>, vector<64x8xf32>, vector<2x8xf32> -> vector<2x8xf32>
    %104 = tpu.concatenate %103, %103, %103, %103 in 1 : vector<2x8xf32>, vector<2x8xf32>, vector<2x8xf32>, vector<2x8xf32> -> vector<2x32xf32>
    %105 = arith.divf %102, %104 : vector<2x32xf32>
    %cst_61 = arith.constant 0.000000e+00 : f32
    %106 = vector.broadcast %cst_61 : f32 to vector<6x32xf32>
    %107 = tpu.concatenate %105, %106 in 0 : vector<2x32xf32>, vector<6x32xf32> -> vector<8x32xf32>
    %c0_62 = arith.constant 0 : index
    %c0_63 = arith.constant 0 : index
    %108 = vector.load %arg7[%c0_62, %c0_63] : memref<32x128xf32, #tpu.memory_space<vmem>>, vector<32x128xf32>
    %cst_64 = arith.constant dense<0.000000e+00> : vector<8x128xf32>
    %109 = tpu.matmul %107, %108, %cst_64 {dimension_numbers = #tpu.dot_dimension_numbers<[1], [0], [0], [1], [0, 0, 1, 1], [], []>} : vector<8x32xf32>, vector<32x128xf32>, vector<8x128xf32> -> vector<8x128xf32>
    %110 = vector.broadcast %3 : vector<1x128xf32> to vector<8x128xf32>
    %111 = arith.addf %109, %110 : vector<8x128xf32>
    %c0_65 = arith.constant 0 : index
    %c0_66 = arith.constant 0 : index
    %112 = vector.load %arg9[%c0_65, %c0_66] : memref<8x128xf32, #tpu.memory_space<vmem>>, vector<8x128xf32>
    tpu.vector_store %arg9[%c0_65, %c0_66], %111 {strides = array<i32>} : memref<8x128xf32, #tpu.memory_space<vmem>>, vector<8x128xf32>,
    return
  }
}

</mosaic_0001>

<llo_original>
// kernel: embedding_cnn_attention.1
$region0: #{embedding_cnn_attention.1}
  #allocation0 [shape = 'u32[]', space=smem, size = 0x4, offset = 0x4, fixed_abs, tag = 'smem constant byte address 0x4 - core index']
  #allocation1 [shape = 'u32[72,128]{1,0:T(1,128)}', space=vmem, size = 0x9000, scoped, tag = 'internal scratch']
  %s0 = inlined_call_operand.vmem [shape: s32[72,1], index: 0, kind: input, shape index: {}]
  %s1 = inlined_call_operand.vmem [shape: bf16[32,32], index: 1, kind: input, shape index: {}]
  %s2 = inlined_call_operand.vmem [shape: bf16[160,128], index: 2, kind: input, shape index: {}]
  %s3 = inlined_call_operand.vmem [shape: bf16[128,32], index: 3, kind: input, shape index: {}]
  %s4 = inlined_call_operand.vmem [shape: bf16[32,8], index: 4, kind: input, shape index: {}]
  %s5 = inlined_call_operand.vmem [shape: bf16[128,32], index: 5, kind: input, shape index: {}]
  %s6 = inlined_call_operand.vmem [shape: f32[2,64], index: 6, kind: input, shape index: {}]
  %s7 = inlined_call_operand.vmem [shape: f32[32,128], index: 7, kind: input, shape index: {}]
  %s8 = inlined_call_operand.vmem [shape: f32[4,128], index: 8, kind: input, shape index: {}]
  %s9 = inlined_call_operand.vmem [shape: f32[8,128], index: 9, kind: output, shape index: {}]
  %s10 = sld [smem:[#allocation0]]
  $region46: #{embedding_cnn_attention.1} parent=0
    _
  %s12 = ssub.s32 1, %s10
  %s13 = scalar_select 0, %s12, %s10
  // Predicated region
  $region2: #{embedding_cnn_attention.1} parent=0 // pred_check
    _
  $region3: #{embedding_cnn_attention.1} parent=0 // pred_check_branch
    %15 = sbr.rel (0) target = $region5
  $region4: #{embedding_cnn_attention.1} parent=0 // pred_region
    _
  $region5: #{embedding_cnn_attention.1} parent=0 // pred_fallthru
    _
  // Predicated region
  $region6: #{embedding_cnn_attention.1} parent=0 // pred_check
    _
  $region7: #{embedding_cnn_attention.1} parent=0 // pred_check_branch
    %17 = sbr.rel (0) target = $region9
  $region8: #{embedding_cnn_attention.1} parent=0 // pred_region
    _
  $region9: #{embedding_cnn_attention.1} parent=0 // pred_fallthru
    _
  // Predicated region
  $region10: #{embedding_cnn_attention.1} parent=0 // pred_check
    _
  $region11: #{embedding_cnn_attention.1} parent=0 // pred_check_branch
    %19 = sbr.rel (0) target = $region13
  $region12: #{embedding_cnn_attention.1} parent=0 // pred_region
    _
  $region13: #{embedding_cnn_attention.1} parent=0 // pred_fallthru
    _
  // Predicated region
  $region14: #{embedding_cnn_attention.1} parent=0 // pred_check
    _
  $region15: #{embedding_cnn_attention.1} parent=0 // pred_check_branch
    %21 = sbr.rel (0) target = $region17
  $region16: #{embedding_cnn_attention.1} parent=0 // pred_region
    _
  $region17: #{embedding_cnn_attention.1} parent=0 // pred_fallthru
    _
  // Predicated region
  $region18: #{embedding_cnn_attention.1} parent=0 // pred_check
    _
  $region19: #{embedding_cnn_attention.1} parent=0 // pred_check_branch
    %23 = sbr.rel (0) target = $region21
  $region20: #{embedding_cnn_attention.1} parent=0 // pred_region
    _
  $region21: #{embedding_cnn_attention.1} parent=0 // pred_fallthru
    _
  // Predicated region
  $region22: #{embedding_cnn_attention.1} parent=0 // pred_check
    _
  $region23: #{embedding_cnn_attention.1} parent=0 // pred_check_branch
    %25 = sbr.rel (0) target = $region25
  $region24: #{embedding_cnn_attention.1} parent=0 // pred_region
    _
  $region25: #{embedding_cnn_attention.1} parent=0 // pred_fallthru
    _
  // Predicated region
  $region26: #{embedding_cnn_attention.1} parent=0 // pred_check
    _
  $region27: #{embedding_cnn_attention.1} parent=0 // pred_check_branch
    %27 = sbr.rel (0) target = $region29
  $region28: #{embedding_cnn_attention.1} parent=0 // pred_region
    _
  $region29: #{embedding_cnn_attention.1} parent=0 // pred_fallthru
    _
  // Predicated region
  $region30: #{embedding_cnn_attention.1} parent=0 // pred_check
    _
  $region31: #{embedding_cnn_attention.1} parent=0 // pred_check_branch
    %29 = sbr.rel (0) target = $region33
  $region32: #{embedding_cnn_attention.1} parent=0 // pred_region
    _
  $region33: #{embedding_cnn_attention.1} parent=0 // pred_fallthru
    _
  // Predicated region
  $region34: #{embedding_cnn_attention.1} parent=0 // pred_check
    _
  $region35: #{embedding_cnn_attention.1} parent=0 // pred_check_branch
    %31 = sbr.rel (0) target = $region37
  $region36: #{embedding_cnn_attention.1} parent=0 // pred_region
    _
  $region37: #{embedding_cnn_attention.1} parent=0 // pred_fallthru
    _
  %v33 = vld [vmem:[%s8] sm:$0x1]
  %v34 = vld [vmem:[%s8 + $0x1] sm:$0x1]
  %v35 = vld [vmem:[%s8 + $0x2] sm:$0x1]
  %v36 = vld [vmem:[%s8 + $0x3] sm:$0x1]
  %v37 = vld [vmem:[%s1] sm:$0xf]
  %v38 = vld [vmem:[%s1 + $0x4] sm:$0xf]
  %v39 = vld [vmem:[%s1 + $0x8] sm:$0xf]
  %v40 = vld [vmem:[%s1 + $0xc] sm:$0xf]
  %v41 = vlaneseq
  %v42 = vand.u32 %v41, 127
  %v43 = vld [vmem:[%s0] sm:$0xff]
  %v44 = vld [vmem:[%s0 + $0x8] sm:$0xff]
  %v45 = vld [vmem:[%s0 + $0x10] sm:$0xff]
  %v46 = vld [vmem:[%s0 + $0x18] sm:$0xff]
  %v47 = vld [vmem:[%s0 + $0x24] sm:$0xff]
  %v48 = vld [vmem:[%s0 + $0x2c] sm:$0xff]
  %v49 = vld [vmem:[%s0 + $0x34] sm:$0xff]
  %v50 = vld [vmem:[%s0 + $0x3c] sm:$0xff]
  %51 = vset.pattern.permute.xlu0 0
  %52 = vperm.xlu0 %51, %v43
  %v53 = vpop.permute.xlu0 %52
  %54 = vset.pattern.permute.xlu0 0
  %55 = vperm.xlu0 %54, %v44
  %v56 = vpop.permute.xlu0 %55
  %57 = vset.pattern.permute.xlu0 0
  %58 = vperm.xlu0 %57, %v45
  %v59 = vpop.permute.xlu0 %58
  %60 = vset.pattern.permute.xlu0 0
  %61 = vperm.xlu0 %60, %v46
  %v62 = vpop.permute.xlu0 %61
  %63 = vset.pattern.permute.xlu0 0
  %64 = vperm.xlu0 %63, %v47
  %v65 = vpop.permute.xlu0 %64
  %66 = vset.pattern.permute.xlu0 0
  %67 = vperm.xlu0 %66, %v48
  %v68 = vpop.permute.xlu0 %67
  %69 = vset.pattern.permute.xlu0 0
  %70 = vperm.xlu0 %69, %v49
  %v71 = vpop.permute.xlu0 %70
  %72 = vset.pattern.permute.xlu0 0
  %73 = vperm.xlu0 %72, %v50
  %v74 = vpop.permute.xlu0 %73
  %vm75 = vcmp.eq.s32.totalorder %v53, %v42
  %vm76 = vcmp.eq.s32.totalorder %v56, %v42
  %vm77 = vcmp.eq.s32.totalorder %v59, %v42
  %vm78 = vcmp.eq.s32.totalorder %v62, %v42
  %vm79 = vcmp.eq.s32.totalorder %v65, %v42
  %vm80 = vcmp.eq.s32.totalorder %v68, %v42
  %vm81 = vcmp.eq.s32.totalorder %v71, %v42
  %vm82 = vcmp.eq.s32.totalorder %v74, %v42
  %v83 = vsel %vm75, 1.0, 0.0
  %v84 = vsel %vm76, 1.0, 0.0
  %v85 = vsel %vm77, 1.0, 0.0
  %v86 = vsel %vm78, 1.0, 0.0
  %v87 = vsel %vm79, 1.0, 0.0
  %v88 = vsel %vm80, 1.0, 0.0
  %v89 = vsel %vm81, 1.0, 0.0
  %v90 = vsel %vm82, 1.0, 0.0
  %v91 = vpack.c.bf16 %v84, %v83
  %v92 = vpack.c.bf16 %v86, %v85
  %v93 = vpack.c.bf16 %v88, %v87
  %v94 = vpack.c.bf16 %v90, %v89
  %v99 = vunpack.c.l.b16 %v37
  %v100 = vunpack.c.l.b16 %v38
  %v101 = vunpack.c.l.b16 %v39
  %v102 = vunpack.c.l.b16 %v40
  %v103 = vpack.c.b16 %v100, %v99
  %v104 = vpack.c.b16 %v102, %v101
  %vm107 = vcmask 261120
  %v109 = vsel %vm107, %v91, 0
  %v112 = vsel %vm107, %v92, 0
  %v115 = vsel %vm107, %v93, 0
  %v118 = vsel %vm107, %v94, 0
  %120 = vmatpush.bf16.msra.mxu0 0
  %121 = vmatpush.bf16.msra.mxu0 0
  %122 = vmatpush.bf16.msra.mxu0 0
  %123 = vmatpush.bf16.msra.mxu0 0
  %124 = vmatpush.bf16.msra.mxu0 0
  %125 = vmatpush.bf16.msra.mxu0 0
  %126 = vmatpush.bf16.msra.mxu0 %v104
  %127 = vmatpush.bf16.msra.mxu0 %v103
  %128 = vmatmul.bf16.gmra.mxu0 %v109
  %v129 = vpop.f32.mrf.mxu0
  %v130 = vadd.f32 0.0, %v129
  %v131 = vpop.f32.mrf.mxu0
  %v132 = vadd.f32 0.0, %v131
  %133 = vmatmul.bf16.gmra.mxu0 %v112
  %v134 = vpop.f32.mrf.mxu0
  %v135 = vadd.f32 0.0, %v134
  %v136 = vpop.f32.mrf.mxu0
  %v137 = vadd.f32 0.0, %v136
  %138 = vmatmul.bf16.gmra.mxu0 %v115
  %v139 = vpop.f32.mrf.mxu0
  %v140 = vadd.f32 0.0, %v139
  %v141 = vpop.f32.mrf.mxu0
  %v142 = vadd.f32 0.0, %v141
  %143 = vmatmul.bf16.gmra.mxu0 %v118
  %v144 = vpop.f32.mrf.mxu0
  %v145 = vadd.f32 0.0, %v144
  %v146 = vpop.f32.mrf.mxu0
  %v147 = vadd.f32 0.0, %v146
  %148 = vdwg.mxu0
  %v149 = vpack.c.bf16 %v132, %v130
  %v150 = vpack.c.bf16 %v137, %v135
  %v151 = vpack.c.bf16 %v142, %v140
  %v152 = vpack.c.bf16 %v147, %v145
  %v153 = vld [vmem:[%s2] sm:$0xf]
  %v154 = vld [vmem:[%s2 + $0x4] sm:$0xf]
  %v155 = vld [vmem:[%s2 + $0x8] sm:$0xf]
  %v156 = vld [vmem:[%s2 + $0xc] sm:$0xf]
  %v157 = vld [vmem:[%s0 + $0x1] sm:$0xff]
  %v158 = vld [vmem:[%s0 + $0x9] sm:$0xff]
  %v159 = vld [vmem:[%s0 + $0x11] sm:$0xff]
  %v160 = vld [vmem:[%s0 + $0x19] sm:$0xff]
  %v161 = vld [vmem:[%s0 + $0x25] sm:$0xff]
  %v162 = vld [vmem:[%s0 + $0x2d] sm:$0xff]
  %v163 = vld [vmem:[%s0 + $0x35] sm:$0xff]
  %v164 = vld [vmem:[%s0 + $0x3d] sm:$0xff]
  %165 = vset.pattern.permute.xlu0 0
  %166 = vperm.xlu0 %165, %v157
  %v167 = vpop.permute.xlu0 %166
  %168 = vset.pattern.permute.xlu0 0
  %169 = vperm.xlu0 %168, %v158
  %v170 = vpop.permute.xlu0 %169
  %171 = vset.pattern.permute.xlu0 0
  %172 = vperm.xlu0 %171, %v159
  %v173 = vpop.permute.xlu0 %172
  %174 = vset.pattern.permute.xlu0 0
  %175 = vperm.xlu0 %174, %v160
  %v176 = vpop.permute.xlu0 %175
  %177 = vset.pattern.permute.xlu0 0
  %178 = vperm.xlu0 %177, %v161
  %v179 = vpop.permute.xlu0 %178
  %180 = vset.pattern.permute.xlu0 0
  %181 = vperm.xlu0 %180, %v162
  %v182 = vpop.permute.xlu0 %181
  %183 = vset.pattern.permute.xlu0 0
  %184 = vperm.xlu0 %183, %v163
  %v185 = vpop.permute.xlu0 %184
  %186 = vset.pattern.permute.xlu0 0
  %187 = vperm.xlu0 %186, %v164
  %v188 = vpop.permute.xlu0 %187
  %vm189 = vcmp.eq.s32.totalorder %v167, %v42
  %vm190 = vcmp.eq.s32.totalorder %v170, %v42
  %vm191 = vcmp.eq.s32.totalorder %v173, %v42
  %vm192 = vcmp.eq.s32.totalorder %v176, %v42
  %vm193 = vcmp.eq.s32.totalorder %v179, %v42
  %vm194 = vcmp.eq.s32.totalorder %v182, %v42
  %vm195 = vcmp.eq.s32.totalorder %v185, %v42
  %vm196 = vcmp.eq.s32.totalorder %v188, %v42
  %v197 = vsel %vm189, 1.0, 0.0
  %v198 = vsel %vm190, 1.0, 0.0
  %v199 = vsel %vm191, 1.0, 0.0
  %v200 = vsel %vm192, 1.0, 0.0
  %v201 = vsel %vm193, 1.0, 0.0
  %v202 = vsel %vm194, 1.0, 0.0
  %v203 = vsel %vm195, 1.0, 0.0
  %v204 = vsel %vm196, 1.0, 0.0
  %v205 = vpack.c.bf16 %v198, %v197
  %v206 = vpack.c.bf16 %v200, %v199
  %v207 = vpack.c.bf16 %v202, %v201
  %v208 = vpack.c.bf16 %v204, %v203
  %v210 = vsel %vm107, %v205, 0
  %v213 = vsel %vm107, %v206, 0
  %v216 = vsel %vm107, %v207, 0
  %v219 = vsel %vm107, %v208, 0
  %221 = vmatpush.bf16.msra.mxu0 0
  %222 = vmatpush.bf16.msra.mxu0 0
  %223 = vmatpush.bf16.msra.mxu0 0
  %224 = vmatpush.bf16.msra.mxu0 0
  %225 = vmatpush.bf16.msra.mxu0 0
  %226 = vmatpush.bf16.msra.mxu0 0
  %227 = vmatpush.bf16.msra.mxu0 %v104
  %228 = vmatpush.bf16.msra.mxu0 %v103
  %229 = vmatmul.bf16.gmra.mxu0 %v210
  %v230 = vpop.f32.mrf.mxu0
  %v231 = vadd.f32 0.0, %v230
  %v232 = vpop.f32.mrf.mxu0
  %v233 = vadd.f32 0.0, %v232
  %234 = vmatmul.bf16.gmra.mxu0 %v213
  %v235 = vpop.f32.mrf.mxu0
  %v236 = vadd.f32 0.0, %v235
  %v237 = vpop.f32.mrf.mxu0
  %v238 = vadd.f32 0.0, %v237
  %239 = vmatmul.bf16.gmra.mxu0 %v216
  %v240 = vpop.f32.mrf.mxu0
  %v241 = vadd.f32 0.0, %v240
  %v242 = vpop.f32.mrf.mxu0
  %v243 = vadd.f32 0.0, %v242
  %244 = vmatmul.bf16.gmra.mxu0 %v219
  %v245 = vpop.f32.mrf.mxu0
  %v246 = vadd.f32 0.0, %v245
  %v247 = vpop.f32.mrf.mxu0
  %v248 = vadd.f32 0.0, %v247
  %249 = vdwg.mxu0
  %v250 = vpack.c.bf16 %v233, %v231
  %v251 = vpack.c.bf16 %v238, %v236
  %v252 = vpack.c.bf16 %v243, %v241
  %v253 = vpack.c.bf16 %v248, %v246
  %v254 = vld [vmem:[%s2 + $0x10] sm:$0xf]
  %v255 = vld [vmem:[%s2 + $0x14] sm:$0xf]
  %v256 = vld [vmem:[%s2 + $0x18] sm:$0xf]
  %v257 = vld [vmem:[%s2 + $0x1c] sm:$0xf]
  %v262 = vunpack.c.l.b16 %v254
  %v263 = vunpack.c.l.b16 %v255
  %v264 = vunpack.c.l.b16 %v256
  %v265 = vunpack.c.l.b16 %v257
  %v266 = vpack.c.b16 %v263, %v262
  %v267 = vpack.c.b16 %v265, %v264
  %v271 = vsel %vm107, %v250, 0
  %v274 = vsel %vm107, %v251, 0
  %v277 = vsel %vm107, %v252, 0
  %v280 = vsel %vm107, %v253, 0
  %282 = vmatpush.bf16.msra.mxu0 0
  %283 = vmatpush.bf16.msra.mxu0 0
  %284 = vmatpush.bf16.msra.mxu0 0
  %285 = vmatpush.bf16.msra.mxu0 0
  %286 = vmatpush.bf16.msra.mxu0 0
  %287 = vmatpush.bf16.msra.mxu0 0
  %288 = vmatpush.bf16.msra.mxu0 %v267
  %289 = vmatpush.bf16.msra.mxu0 %v266
  %290 = vmatmul.bf16.gmra.mxu0 %v271
  %v291 = vpop.f32.mrf.mxu0
  %v292 = vadd.f32 0.0, %v291
  %v293 = vpop.f32.mrf.mxu0
  %v294 = vadd.f32 0.0, %v293
  %295 = vmatmul.bf16.gmra.mxu0 %v274
  %v296 = vpop.f32.mrf.mxu0
  %v297 = vadd.f32 0.0, %v296
  %v298 = vpop.f32.mrf.mxu0
  %v299 = vadd.f32 0.0, %v298
  %300 = vmatmul.bf16.gmra.mxu0 %v277
  %v301 = vpop.f32.mrf.mxu0
  %v302 = vadd.f32 0.0, %v301
  %v303 = vpop.f32.mrf.mxu0
  %v304 = vadd.f32 0.0, %v303
  %305 = vmatmul.bf16.gmra.mxu0 %v280
  %v306 = vpop.f32.mrf.mxu0
  %v307 = vadd.f32 0.0, %v306
  %v308 = vpop.f32.mrf.mxu0
  %v309 = vadd.f32 0.0, %v308
  %310 = vdwg.mxu0
  %v315 = vunpack.c.l.b16 %v153
  %v316 = vunpack.c.l.b16 %v154
  %v317 = vunpack.c.l.b16 %v155
  %v318 = vunpack.c.l.b16 %v156
  %v319 = vpack.c.b16 %v316, %v315
  %v320 = vpack.c.b16 %v318, %v317
  %v324 = vsel %vm107, %v149, 0
  %v327 = vsel %vm107, %v150, 0
  %v330 = vsel %vm107, %v151, 0
  %v333 = vsel %vm107, %v152, 0
  %335 = vmatpush.bf16.msra.mxu0 0
  %336 = vmatpush.bf16.msra.mxu0 0
  %337 = vmatpush.bf16.msra.mxu0 0
  %338 = vmatpush.bf16.msra.mxu0 0
  %339 = vmatpush.bf16.msra.mxu0 0
  %340 = vmatpush.bf16.msra.mxu0 0
  %341 = vmatpush.bf16.msra.mxu0 %v320
  %342 = vmatpush.bf16.msra.mxu0 %v319
  %343 = vmatmul.bf16.gmra.mxu0 %v324
  %v344 = vpop.f32.mrf.mxu0
  %v345 = vadd.f32 %v292, %v344
  %v346 = vpop.f32.mrf.mxu0
  %v347 = vadd.f32 %v294, %v346
  %348 = vmatmul.bf16.gmra.mxu0 %v327
  %v349 = vpop.f32.mrf.mxu0
  %v350 = vadd.f32 %v297, %v349
  %v351 = vpop.f32.mrf.mxu0
  %v352 = vadd.f32 %v299, %v351
  %353 = vmatmul.bf16.gmra.mxu0 %v330
  %v354 = vpop.f32.mrf.mxu0
  %v355 = vadd.f32 %v302, %v354
  %v356 = vpop.f32.mrf.mxu0
  %v357 = vadd.f32 %v304, %v356
  %358 = vmatmul.bf16.gmra.mxu0 %v333
  %v359 = vpop.f32.mrf.mxu0
  %v360 = vadd.f32 %v307, %v359
  %v361 = vpop.f32.mrf.mxu0
  %v362 = vadd.f32 %v309, %v361
  %363 = vdwg.mxu0
  %v364 = vld [vmem:[%s0 + $0x2] sm:$0xff]
  %v365 = vld [vmem:[%s0 + $0xa] sm:$0xff]
  %v366 = vld [vmem:[%s0 + $0x12] sm:$0xff]
  %v367 = vld [vmem:[%s0 + $0x1a] sm:$0xff]
  %v368 = vld [vmem:[%s0 + $0x26] sm:$0xff]
  %v369 = vld [vmem:[%s0 + $0x2e] sm:$0xff]
  %v370 = vld [vmem:[%s0 + $0x36] sm:$0xff]
  %v371 = vld [vmem:[%s0 + $0x3e] sm:$0xff]
  %372 = vset.pattern.permute.xlu0 0
  %373 = vperm.xlu0 %372, %v364
  %v374 = vpop.permute.xlu0 %373
  %375 = vset.pattern.permute.xlu0 0
  %376 = vperm.xlu0 %375, %v365
  %v377 = vpop.permute.xlu0 %376
  %378 = vset.pattern.permute.xlu0 0
  %379 = vperm.xlu0 %378, %v366
  %v380 = vpop.permute.xlu0 %379
  %381 = vset.pattern.permute.xlu0 0
  %382 = vperm.xlu0 %381, %v367
  %v383 = vpop.permute.xlu0 %382
  %384 = vset.pattern.permute.xlu0 0
  %385 = vperm.xlu0 %384, %v368
  %v386 = vpop.permute.xlu0 %385
  %387 = vset.pattern.permute.xlu0 0
  %388 = vperm.xlu0 %387, %v369
  %v389 = vpop.permute.xlu0 %388
  %390 = vset.pattern.permute.xlu0 0
  %391 = vperm.xlu0 %390, %v370
  %v392 = vpop.permute.xlu0 %391
  %393 = vset.pattern.permute.xlu0 0
  %394 = vperm.xlu0 %393, %v371
  %v395 = vpop.permute.xlu0 %394
  %vm396 = vcmp.eq.s32.totalorder %v374, %v42
  %vm397 = vcmp.eq.s32.totalorder %v377, %v42
  %vm398 = vcmp.eq.s32.totalorder %v380, %v42
  %vm399 = vcmp.eq.s32.totalorder %v383, %v42
  %vm400 = vcmp.eq.s32.totalorder %v386, %v42
  %vm401 = vcmp.eq.s32.totalorder %v389, %v42
  %vm402 = vcmp.eq.s32.totalorder %v392, %v42
  %vm403 = vcmp.eq.s32.totalorder %v395, %v42
  %v404 = vsel %vm396, 1.0, 0.0
  %v405 = vsel %vm397, 1.0, 0.0
  %v406 = vsel %vm398, 1.0, 0.0
  %v407 = vsel %vm399, 1.0, 0.0
  %v408 = vsel %vm400, 1.0, 0.0
  %v409 = vsel %vm401, 1.0, 0.0
  %v410 = vsel %vm402, 1.0, 0.0
  %v411 = vsel %vm403, 1.0, 0.0
  %v412 = vpack.c.bf16 %v405, %v404
  %v413 = vpack.c.bf16 %v407, %v406
  %v414 = vpack.c.bf16 %v409, %v408
  %v415 = vpack.c.bf16 %v411, %v410
  %v417 = vsel %vm107, %v412, 0
  %v420 = vsel %vm107, %v413, 0
  %v423 = vsel %vm107, %v414, 0
  %v426 = vsel %vm107, %v415, 0
  %428 = vmatpush.bf16.msra.mxu0 0
  %429 = vmatpush.bf16.msra.mxu0 0
  %430 = vmatpush.bf16.msra.mxu0 0
  %431 = vmatpush.bf16.msra.mxu0 0
  %432 = vmatpush.bf16.msra.mxu0 0
  %433 = vmatpush.bf16.msra.mxu0 0
  %434 = vmatpush.bf16.msra.mxu0 %v104
  %435 = vmatpush.bf16.msra.mxu0 %v103
  %436 = vmatmul.bf16.gmra.mxu0 %v417
  %v437 = vpop.f32.mrf.mxu0
  %v438 = vadd.f32 0.0, %v437
  %v439 = vpop.f32.mrf.mxu0
  %v440 = vadd.f32 0.0, %v439
  %441 = vmatmul.bf16.gmra.mxu0 %v420
  %v442 = vpop.f32.mrf.mxu0
  %v443 = vadd.f32 0.0, %v442
  %v444 = vpop.f32.mrf.mxu0
  %v445 = vadd.f32 0.0, %v444
  %446 = vmatmul.bf16.gmra.mxu0 %v423
  %v447 = vpop.f32.mrf.mxu0
  %v448 = vadd.f32 0.0, %v447
  %v449 = vpop.f32.mrf.mxu0
  %v450 = vadd.f32 0.0, %v449
  %451 = vmatmul.bf16.gmra.mxu0 %v426
  %v452 = vpop.f32.mrf.mxu0
  %v453 = vadd.f32 0.0, %v452
  %v454 = vpop.f32.mrf.mxu0
  %v455 = vadd.f32 0.0, %v454
  %456 = vdwg.mxu0
  %v457 = vpack.c.bf16 %v440, %v438
  %v458 = vpack.c.bf16 %v445, %v443
  %v459 = vpack.c.bf16 %v450, %v448
  %v460 = vpack.c.bf16 %v455, %v453
  %v461 = vld [vmem:[%s2 + $0x20] sm:$0xf]
  %v462 = vld [vmem:[%s2 + $0x24] sm:$0xf]
  %v463 = vld [vmem:[%s2 + $0x28] sm:$0xf]
  %v464 = vld [vmem:[%s2 + $0x2c] sm:$0xf]
  %v469 = vunpack.c.l.b16 %v461
  %v470 = vunpack.c.l.b16 %v462
  %v471 = vunpack.c.l.b16 %v463
  %v472 = vunpack.c.l.b16 %v464
  %v473 = vpack.c.b16 %v470, %v469
  %v474 = vpack.c.b16 %v472, %v471
  %v478 = vsel %vm107, %v457, 0
  %v481 = vsel %vm107, %v458, 0
  %v484 = vsel %vm107, %v459, 0
  %v487 = vsel %vm107, %v460, 0
  %489 = vmatpush.bf16.msra.mxu0 0
  %490 = vmatpush.bf16.msra.mxu0 0
  %491 = vmatpush.bf16.msra.mxu0 0
  %492 = vmatpush.bf16.msra.mxu0 0
  %493 = vmatpush.bf16.msra.mxu0 0
  %494 = vmatpush.bf16.msra.mxu0 0
  %495 = vmatpush.bf16.msra.mxu0 %v474
  %496 = vmatpush.bf16.msra.mxu0 %v473
  %497 = vmatmul.bf16.gmra.mxu0 %v478
  %v498 = vpop.f32.mrf.mxu0
  %v499 = vadd.f32 0.0, %v498
  %v500 = vpop.f32.mrf.mxu0
  %v501 = vadd.f32 0.0, %v500
  %502 = vmatmul.bf16.gmra.mxu0 %v481
  %v503 = vpop.f32.mrf.mxu0
  %v504 = vadd.f32 0.0, %v503
  %v505 = vpop.f32.mrf.mxu0
  %v506 = vadd.f32 0.0, %v505
  %507 = vmatmul.bf16.gmra.mxu0 %v484
  %v508 = vpop.f32.mrf.mxu0
  %v509 = vadd.f32 0.0, %v508
  %v510 = vpop.f32.mrf.mxu0
  %v511 = vadd.f32 0.0, %v510
  %512 = vmatmul.bf16.gmra.mxu0 %v487
  %v513 = vpop.f32.mrf.mxu0
  %v514 = vadd.f32 0.0, %v513
  %v515 = vpop.f32.mrf.mxu0
  %v516 = vadd.f32 0.0, %v515
  %517 = vdwg.mxu0
  %v518 = vadd.f32 %v345, %v499
  %v519 = vadd.f32 %v347, %v501
  %v520 = vadd.f32 %v350, %v504
  %v521 = vadd.f32 %v352, %v506
  %v522 = vadd.f32 %v355, %v509
  %v523 = vadd.f32 %v357, %v511
  %v524 = vadd.f32 %v360, %v514
  %v525 = vadd.f32 %v362, %v516
  %v526 = vld [vmem:[%s0 + $0x3] sm:$0xff]
  %v527 = vld [vmem:[%s0 + $0xb] sm:$0xff]
  %v528 = vld [vmem:[%s0 + $0x13] sm:$0xff]
  %v529 = vld [vmem:[%s0 + $0x1b] sm:$0xff]
  %v530 = vld [vmem:[%s0 + $0x27] sm:$0xff]
  %v531 = vld [vmem:[%s0 + $0x2f] sm:$0xff]
  %v532 = vld [vmem:[%s0 + $0x37] sm:$0xff]
  %v533 = vld [vmem:[%s0 + $0x3f] sm:$0xff]
  %534 = vset.pattern.permute.xlu0 0
  %535 = vperm.xlu0 %534, %v526
  %v536 = vpop.permute.xlu0 %535
  %537 = vset.pattern.permute.xlu0 0
  %538 = vperm.xlu0 %537, %v527
  %v539 = vpop.permute.xlu0 %538
  %540 = vset.pattern.permute.xlu0 0
  %541 = vperm.xlu0 %540, %v528
  %v542 = vpop.permute.xlu0 %541
  %543 = vset.pattern.permute.xlu0 0
  %544 = vperm.xlu0 %543, %v529
  %v545 = vpop.permute.xlu0 %544
  %546 = vset.pattern.permute.xlu0 0
  %547 = vperm.xlu0 %546, %v530
  %v548 = vpop.permute.xlu0 %547
  %549 = vset.pattern.permute.xlu0 0
  %550 = vperm.xlu0 %549, %v531
  %v551 = vpop.permute.xlu0 %550
  %552 = vset.pattern.permute.xlu0 0
  %553 = vperm.xlu0 %552, %v532
  %v554 = vpop.permute.xlu0 %553
  %555 = vset.pattern.permute.xlu0 0
  %556 = vperm.xlu0 %555, %v533
  %v557 = vpop.permute.xlu0 %556
  %vm558 = vcmp.eq.s32.totalorder %v536, %v42
  %vm559 = vcmp.eq.s32.totalorder %v539, %v42
  %vm560 = vcmp.eq.s32.totalorder %v542, %v42
  %vm561 = vcmp.eq.s32.totalorder %v545, %v42
  %vm562 = vcmp.eq.s32.totalorder %v548, %v42
  %vm563 = vcmp.eq.s32.totalorder %v551, %v42
  %vm564 = vcmp.eq.s32.totalorder %v554, %v42
  %vm565 = vcmp.eq.s32.totalorder %v557, %v42
  %v566 = vsel %vm558, 1.0, 0.0
  %v567 = vsel %vm559, 1.0, 0.0
  %v568 = vsel %vm560, 1.0, 0.0
  %v569 = vsel %vm561, 1.0, 0.0
  %v570 = vsel %vm562, 1.0, 0.0
  %v571 = vsel %vm563, 1.0, 0.0
  %v572 = vsel %vm564, 1.0, 0.0
  %v573 = vsel %vm565, 1.0, 0.0
  %v574 = vpack.c.bf16 %v567, %v566
  %v575 = vpack.c.bf16 %v569, %v568
  %v576 = vpack.c.bf16 %v571, %v570
  %v577 = vpack.c.bf16 %v573, %v572
  %v579 = vsel %vm107, %v574, 0
  %v582 = vsel %vm107, %v575, 0
  %v585 = vsel %vm107, %v576, 0
  %v588 = vsel %vm107, %v577, 0
  %590 = vmatpush.bf16.msra.mxu0 0
  %591 = vmatpush.bf16.msra.mxu0 0
  %592 = vmatpush.bf16.msra.mxu0 0
  %593 = vmatpush.bf16.msra.mxu0 0
  %594 = vmatpush.bf16.msra.mxu0 0
  %595 = vmatpush.bf16.msra.mxu0 0
  %596 = vmatpush.bf16.msra.mxu0 %v104
  %597 = vmatpush.bf16.msra.mxu0 %v103
  %598 = vmatmul.bf16.gmra.mxu0 %v579
  %v599 = vpop.f32.mrf.mxu0
  %v600 = vadd.f32 0.0, %v599
  %v601 = vpop.f32.mrf.mxu0
  %v602 = vadd.f32 0.0, %v601
  %603 = vmatmul.bf16.gmra.mxu0 %v582
  %v604 = vpop.f32.mrf.mxu0
  %v605 = vadd.f32 0.0, %v604
  %v606 = vpop.f32.mrf.mxu0
  %v607 = vadd.f32 0.0, %v606
  %608 = vmatmul.bf16.gmra.mxu0 %v585
  %v609 = vpop.f32.mrf.mxu0
  %v610 = vadd.f32 0.0, %v609
  %v611 = vpop.f32.mrf.mxu0
  %v612 = vadd.f32 0.0, %v611
  %613 = vmatmul.bf16.gmra.mxu0 %v588
  %v614 = vpop.f32.mrf.mxu0
  %v615 = vadd.f32 0.0, %v614
  %v616 = vpop.f32.mrf.mxu0
  %v617 = vadd.f32 0.0, %v616
  %618 = vdwg.mxu0
  %v619 = vpack.c.bf16 %v602, %v600
  %v620 = vpack.c.bf16 %v607, %v605
  %v621 = vpack.c.bf16 %v612, %v610
  %v622 = vpack.c.bf16 %v617, %v615
  %v623 = vld [vmem:[%s2 + $0x30] sm:$0xf]
  %v624 = vld [vmem:[%s2 + $0x34] sm:$0xf]
  %v625 = vld [vmem:[%s2 + $0x38] sm:$0xf]
  %v626 = vld [vmem:[%s2 + $0x3c] sm:$0xf]
  %v631 = vunpack.c.l.b16 %v623
  %v632 = vunpack.c.l.b16 %v624
  %v633 = vunpack.c.l.b16 %v625
  %v634 = vunpack.c.l.b16 %v626
  %v635 = vpack.c.b16 %v632, %v631
  %v636 = vpack.c.b16 %v634, %v633
  %v640 = vsel %vm107, %v619, 0
  %v643 = vsel %vm107, %v620, 0
  %v646 = vsel %vm107, %v621, 0
  %v649 = vsel %vm107, %v622, 0
  %651 = vmatpush.bf16.msra.mxu0 0
  %652 = vmatpush.bf16.msra.mxu0 0
  %653 = vmatpush.bf16.msra.mxu0 0
  %654 = vmatpush.bf16.msra.mxu0 0
  %655 = vmatpush.bf16.msra.mxu0 0
  %656 = vmatpush.bf16.msra.mxu0 0
  %657 = vmatpush.bf16.msra.mxu0 %v636
  %658 = vmatpush.bf16.msra.mxu0 %v635
  %659 = vmatmul.bf16.gmra.mxu0 %v640
  %v660 = vpop.f32.mrf.mxu0
  %v661 = vadd.f32 0.0, %v660
  %v662 = vpop.f32.mrf.mxu0
  %v663 = vadd.f32 0.0, %v662
  %664 = vmatmul.bf16.gmra.mxu0 %v643
  %v665 = vpop.f32.mrf.mxu0
  %v666 = vadd.f32 0.0, %v665
  %v667 = vpop.f32.mrf.mxu0
  %v668 = vadd.f32 0.0, %v667
  %669 = vmatmul.bf16.gmra.mxu0 %v646
  %v670 = vpop.f32.mrf.mxu0
  %v671 = vadd.f32 0.0, %v670
  %v672 = vpop.f32.mrf.mxu0
  %v673 = vadd.f32 0.0, %v672
  %674 = vmatmul.bf16.gmra.mxu0 %v649
  %v675 = vpop.f32.mrf.mxu0
  %v676 = vadd.f32 0.0, %v675
  %v677 = vpop.f32.mrf.mxu0
  %v678 = vadd.f32 0.0, %v677
  %679 = vdwg.mxu0
  %v680 = vadd.f32 %v518, %v661
  %v681 = vadd.f32 %v519, %v663
  %v682 = vadd.f32 %v520, %v666
  %v683 = vadd.f32 %v521, %v668
  %v684 = vadd.f32 %v522, %v671
  %v685 = vadd.f32 %v523, %v673
  %v686 = vadd.f32 %v524, %v676
  %v687 = vadd.f32 %v525, %v678
  %v688 = vld [vmem:[%s0 + $0x4] sm:$0xff]
  %v689 = vld [vmem:[%s0 + $0xc] sm:$0xff]
  %v690 = vld [vmem:[%s0 + $0x14] sm:$0xff]
  %v691 = vld [vmem:[%s0 + $0x1c] sm:$0xff]
  %v692 = vld [vmem:[%s0 + $0x28] sm:$0xff]
  %v693 = vld [vmem:[%s0 + $0x30] sm:$0xff]
  %v694 = vld [vmem:[%s0 + $0x38] sm:$0xff]
  %v695 = vld [vmem:[%s0 + $0x40] sm:$0xff]
  %696 = vset.pattern.permute.xlu0 0
  %697 = vperm.xlu0 %696, %v688
  %v698 = vpop.permute.xlu0 %697
  %699 = vset.pattern.permute.xlu0 0
  %700 = vperm.xlu0 %699, %v689
  %v701 = vpop.permute.xlu0 %700
  %702 = vset.pattern.permute.xlu0 0
  %703 = vperm.xlu0 %702, %v690
  %v704 = vpop.permute.xlu0 %703
  %705 = vset.pattern.permute.xlu0 0
  %706 = vperm.xlu0 %705, %v691
  %v707 = vpop.permute.xlu0 %706
  %708 = vset.pattern.permute.xlu0 0
  %709 = vperm.xlu0 %708, %v692
  %v710 = vpop.permute.xlu0 %709
  %711 = vset.pattern.permute.xlu0 0
  %712 = vperm.xlu0 %711, %v693
  %v713 = vpop.permute.xlu0 %712
  %714 = vset.pattern.permute.xlu0 0
  %715 = vperm.xlu0 %714, %v694
  %v716 = vpop.permute.xlu0 %715
  %717 = vset.pattern.permute.xlu0 0
  %718 = vperm.xlu0 %717, %v695
  %v719 = vpop.permute.xlu0 %718
  %vm720 = vcmp.eq.s32.totalorder %v698, %v42
  %vm721 = vcmp.eq.s32.totalorder %v701, %v42
  %vm722 = vcmp.eq.s32.totalorder %v704, %v42
  %vm723 = vcmp.eq.s32.totalorder %v707, %v42
  %vm724 = vcmp.eq.s32.totalorder %v710, %v42
  %vm725 = vcmp.eq.s32.totalorder %v713, %v42
  %vm726 = vcmp.eq.s32.totalorder %v716, %v42
  %vm727 = vcmp.eq.s32.totalorder %v719, %v42
  %v728 = vsel %vm720, 1.0, 0.0
  %v729 = vsel %vm721, 1.0, 0.0
  %v730 = vsel %vm722, 1.0, 0.0
  %v731 = vsel %vm723, 1.0, 0.0
  %v732 = vsel %vm724, 1.0, 0.0
  %v733 = vsel %vm725, 1.0, 0.0
  %v734 = vsel %vm726, 1.0, 0.0
  %v735 = vsel %vm727, 1.0, 0.0
  %v736 = vpack.c.bf16 %v729, %v728
  %v737 = vpack.c.bf16 %v731, %v730
  %v738 = vpack.c.bf16 %v733, %v732
  %v739 = vpack.c.bf16 %v735, %v734
  %v741 = vsel %vm107, %v736, 0
  %v744 = vsel %vm107, %v737, 0
  %v747 = vsel %vm107, %v738, 0
  %v750 = vsel %vm107, %v739, 0
  %752 = vmatpush.bf16.msra.mxu0 0
  %753 = vmatpush.bf16.msra.mxu0 0
  %754 = vmatpush.bf16.msra.mxu0 0
  %755 = vmatpush.bf16.msra.mxu0 0
  %756 = vmatpush.bf16.msra.mxu0 0
  %757 = vmatpush.bf16.msra.mxu0 0
  %758 = vmatpush.bf16.msra.mxu0 %v104
  %759 = vmatpush.bf16.msra.mxu0 %v103
  %760 = vmatmul.bf16.gmra.mxu0 %v741
  %v761 = vpop.f32.mrf.mxu0
  %v762 = vadd.f32 0.0, %v761
  %v763 = vpop.f32.mrf.mxu0
  %v764 = vadd.f32 0.0, %v763
  %765 = vmatmul.bf16.gmra.mxu0 %v744
  %v766 = vpop.f32.mrf.mxu0
  %v767 = vadd.f32 0.0, %v766
  %v768 = vpop.f32.mrf.mxu0
  %v769 = vadd.f32 0.0, %v768
  %770 = vmatmul.bf16.gmra.mxu0 %v747
  %v771 = vpop.f32.mrf.mxu0
  %v772 = vadd.f32 0.0, %v771
  %v773 = vpop.f32.mrf.mxu0
  %v774 = vadd.f32 0.0, %v773
  %775 = vmatmul.bf16.gmra.mxu0 %v750
  %v776 = vpop.f32.mrf.mxu0
  %v777 = vadd.f32 0.0, %v776
  %v778 = vpop.f32.mrf.mxu0
  %v779 = vadd.f32 0.0, %v778
  %780 = vdwg.mxu0
  %v781 = vpack.c.bf16 %v764, %v762
  %v782 = vpack.c.bf16 %v769, %v767
  %v783 = vpack.c.bf16 %v774, %v772
  %v784 = vpack.c.bf16 %v779, %v777
  %v785 = vld [vmem:[%s2 + $0x40] sm:$0xf]
  %v786 = vld [vmem:[%s2 + $0x44] sm:$0xf]
  %v787 = vld [vmem:[%s2 + $0x48] sm:$0xf]
  %v788 = vld [vmem:[%s2 + $0x4c] sm:$0xf]
  %v793 = vunpack.c.l.b16 %v785
  %v794 = vunpack.c.l.b16 %v786
  %v795 = vunpack.c.l.b16 %v787
  %v796 = vunpack.c.l.b16 %v788
  %v797 = vpack.c.b16 %v794, %v793
  %v798 = vpack.c.b16 %v796, %v795
  %v802 = vsel %vm107, %v781, 0
  %v805 = vsel %vm107, %v782, 0
  %v808 = vsel %vm107, %v783, 0
  %v811 = vsel %vm107, %v784, 0
  %813 = vmatpush.bf16.msra.mxu0 0
  %814 = vmatpush.bf16.msra.mxu0 0
  %815 = vmatpush.bf16.msra.mxu0 0
  %816 = vmatpush.bf16.msra.mxu0 0
  %817 = vmatpush.bf16.msra.mxu0 0
  %818 = vmatpush.bf16.msra.mxu0 0
  %819 = vmatpush.bf16.msra.mxu0 %v798
  %820 = vmatpush.bf16.msra.mxu0 %v797
  %821 = vmatmul.bf16.gmra.mxu0 %v802
  %v822 = vpop.f32.mrf.mxu0
  %v823 = vadd.f32 0.0, %v822
  %v824 = vpop.f32.mrf.mxu0
  %v825 = vadd.f32 0.0, %v824
  %826 = vmatmul.bf16.gmra.mxu0 %v805
  %v827 = vpop.f32.mrf.mxu0
  %v828 = vadd.f32 0.0, %v827
  %v829 = vpop.f32.mrf.mxu0
  %v830 = vadd.f32 0.0, %v829
  %831 = vmatmul.bf16.gmra.mxu0 %v808
  %v832 = vpop.f32.mrf.mxu0
  %v833 = vadd.f32 0.0, %v832
  %v834 = vpop.f32.mrf.mxu0
  %v835 = vadd.f32 0.0, %v834
  %836 = vmatmul.bf16.gmra.mxu0 %v811
  %v837 = vpop.f32.mrf.mxu0
  %v838 = vadd.f32 0.0, %v837
  %v839 = vpop.f32.mrf.mxu0
  %v840 = vadd.f32 0.0, %v839
  %841 = vdwg.mxu0
  %v842 = vadd.f32 %v680, %v823
  %v843 = vadd.f32 %v681, %v825
  %v844 = vadd.f32 %v682, %v828
  %v845 = vadd.f32 %v683, %v830
  %v846 = vadd.f32 %v684, %v833
  %v847 = vadd.f32 %v685, %v835
  %v848 = vadd.f32 %v686, %v838
  %v849 = vadd.f32 %v687, %v840
  %v850 = vperm.slane %v33, 0
  %v851 = vadd.f32 %v842, %v850
  %v852 = vadd.f32 %v843, %v850
  %v853 = vadd.f32 %v844, %v850
  %v854 = vadd.f32 %v845, %v850
  %v855 = vadd.f32 %v846, %v850
  %v856 = vadd.f32 %v847, %v850
  %v857 = vadd.f32 %v848, %v850
  %v858 = vadd.f32 %v849, %v850
  %v859 = vmax.f32 %v851, 0.0
  %v860 = vmax.f32 %v852, 0.0
  %v861 = vmax.f32 %v853, 0.0
  %v862 = vmax.f32 %v854, 0.0
  %v863 = vmax.f32 %v855, 0.0
  %v864 = vmax.f32 %v856, 0.0
  %v865 = vmax.f32 %v857, 0.0
  %v866 = vmax.f32 %v858, 0.0
  %v867 = vpack.c.bf16 %v860, %v859
  %v868 = vpack.c.bf16 %v862, %v861
  %v869 = vpack.c.bf16 %v864, %v863
  %v870 = vpack.c.bf16 %v866, %v865
  %v871 = vld [vmem:[%s3] sm:$0xf]
  %v872 = vld [vmem:[%s3 + $0x4] sm:$0xf]
  %v873 = vld [vmem:[%s3 + $0x8] sm:$0xf]
  %v874 = vld [vmem:[%s3 + $0xc] sm:$0xf]
  %v875 = vld [vmem:[%s3 + $0x10] sm:$0xf]
  %v876 = vld [vmem:[%s3 + $0x14] sm:$0xf]
  %v877 = vld [vmem:[%s3 + $0x18] sm:$0xf]
  %v878 = vld [vmem:[%s3 + $0x1c] sm:$0xf]
  %v879 = vld [vmem:[%s3 + $0x20] sm:$0xf]
  %v880 = vld [vmem:[%s3 + $0x24] sm:$0xf]
  %v881 = vld [vmem:[%s3 + $0x28] sm:$0xf]
  %v882 = vld [vmem:[%s3 + $0x2c] sm:$0xf]
  %v883 = vld [vmem:[%s3 + $0x30] sm:$0xf]
  %v884 = vld [vmem:[%s3 + $0x34] sm:$0xf]
  %v885 = vld [vmem:[%s3 + $0x38] sm:$0xf]
  %v886 = vld [vmem:[%s3 + $0x3c] sm:$0xf]
  %v887 = vperm.slane %v34, 0
  %v904 = vunpack.c.l.b16 %v871
  %v905 = vunpack.c.l.b16 %v872
  %v906 = vunpack.c.l.b16 %v873
  %v907 = vunpack.c.l.b16 %v874
  %v908 = vunpack.c.l.b16 %v875
  %v909 = vunpack.c.l.b16 %v876
  %v910 = vunpack.c.l.b16 %v877
  %v911 = vunpack.c.l.b16 %v878
  %v912 = vunpack.c.l.b16 %v879
  %v913 = vunpack.c.l.b16 %v880
  %v914 = vunpack.c.l.b16 %v881
  %v915 = vunpack.c.l.b16 %v882
  %v916 = vunpack.c.l.b16 %v883
  %v917 = vunpack.c.l.b16 %v884
  %v918 = vunpack.c.l.b16 %v885
  %v919 = vunpack.c.l.b16 %v886
  %v920 = vpack.c.b16 %v905, %v904
  %v921 = vpack.c.b16 %v907, %v906
  %v922 = vpack.c.b16 %v909, %v908
  %v923 = vpack.c.b16 %v911, %v910
  %v924 = vpack.c.b16 %v913, %v912
  %v925 = vpack.c.b16 %v915, %v914
  %v926 = vpack.c.b16 %v917, %v916
  %v927 = vpack.c.b16 %v919, %v918
  %936 = vmatpush.bf16.msra.mxu0 %v927
  %937 = vmatpush.bf16.msra.mxu0 %v926
  %938 = vmatpush.bf16.msra.mxu0 %v925
  %939 = vmatpush.bf16.msra.mxu0 %v924
  %940 = vmatpush.bf16.msra.mxu0 %v923
  %941 = vmatpush.bf16.msra.mxu0 %v922
  %942 = vmatpush.bf16.msra.mxu0 %v921
  %943 = vmatpush.bf16.msra.mxu0 %v920
  %944 = vmatmul.bf16.gmra.mxu0 %v867
  %v945 = vpop.f32.mrf.mxu0
  %v946 = vadd.f32 %v887, %v945
  %v947 = vpop.f32.mrf.mxu0
  %v948 = vadd.f32 %v887, %v947
  %949 = vmatmul.bf16.gmra.mxu0 %v868
  %v950 = vpop.f32.mrf.mxu0
  %v951 = vadd.f32 %v887, %v950
  %v952 = vpop.f32.mrf.mxu0
  %v953 = vadd.f32 %v887, %v952
  %954 = vmatmul.bf16.gmra.mxu0 %v869
  %v955 = vpop.f32.mrf.mxu0
  %v956 = vadd.f32 %v887, %v955
  %v957 = vpop.f32.mrf.mxu0
  %v958 = vadd.f32 %v887, %v957
  %959 = vmatmul.bf16.gmra.mxu0 %v870
  %v960 = vpop.f32.mrf.mxu0
  %v961 = vadd.f32 %v887, %v960
  %v962 = vpop.f32.mrf.mxu0
  %v963 = vadd.f32 %v887, %v962
  %964 = vdwg.mxu0
  %v965 = vtanh.pop %v946
  %v966 = vtanh.pop %v948
  %v967 = vtanh.pop %v951
  %v968 = vtanh.pop %v953
  %v969 = vtanh.pop %v956
  %v970 = vtanh.pop %v958
  %v971 = vtanh.pop %v961
  %v972 = vtanh.pop %v963
  %v973 = vpack.c.bf16 %v966, %v965
  %v974 = vpack.c.bf16 %v968, %v967
  %v975 = vpack.c.bf16 %v970, %v969
  %v976 = vpack.c.bf16 %v972, %v971
  %v977 = vld [vmem:[%s4] sm:$0xf]
  %v978 = vld [vmem:[%s4 + $0x4] sm:$0xf]
  %v979 = vld [vmem:[%s4 + $0x8] sm:$0xf]
  %v980 = vld [vmem:[%s4 + $0xc] sm:$0xf]
  %v981 = vperm.slane %v35, 0
  %v986 = vunpack.c.l.b16 %v977
  %v987 = vunpack.c.l.b16 %v978
  %v988 = vunpack.c.l.b16 %v979
  %v989 = vunpack.c.l.b16 %v980
  %v990 = vpack.c.b16 %v987, %v986
  %v991 = vpack.c.b16 %v989, %v988
  %v995 = vsel %vm107, %v973, 0
  %v998 = vsel %vm107, %v974, 0
  %v1001 = vsel %vm107, %v975, 0
  %v1004 = vsel %vm107, %v976, 0
  %1006 = vmatpush.bf16.msra.mxu0 0
  %1007 = vmatpush.bf16.msra.mxu0 0
  %1008 = vmatpush.bf16.msra.mxu0 0
  %1009 = vmatpush.bf16.msra.mxu0 0
  %1010 = vmatpush.bf16.msra.mxu0 0
  %1011 = vmatpush.bf16.msra.mxu0 0
  %1012 = vmatpush.bf16.msra.mxu0 %v991
  %1013 = vmatpush.bf16.msra.mxu0 %v990
  %1014 = vmatmul.bf16.gmra.mxu0 %v995
  %v1015 = vpop.f32.mrf.mxu0
  %v1016 = vadd.f32 %v981, %v1015
  %v1017 = vpop.f32.mrf.mxu0
  %v1018 = vadd.f32 %v981, %v1017
  %1019 = vmatmul.bf16.gmra.mxu0 %v998
  %v1020 = vpop.f32.mrf.mxu0
  %v1021 = vadd.f32 %v981, %v1020
  %v1022 = vpop.f32.mrf.mxu0
  %v1023 = vadd.f32 %v981, %v1022
  %1024 = vmatmul.bf16.gmra.mxu0 %v1001
  %v1025 = vpop.f32.mrf.mxu0
  %v1026 = vadd.f32 %v981, %v1025
  %v1027 = vpop.f32.mrf.mxu0
  %v1028 = vadd.f32 %v981, %v1027
  %1029 = vmatmul.bf16.gmra.mxu0 %v1004
  %v1030 = vpop.f32.mrf.mxu0
  %v1031 = vadd.f32 %v981, %v1030
  %v1032 = vpop.f32.mrf.mxu0
  %v1033 = vadd.f32 %v981, %v1032
  %1034 = vdwg.mxu0
  %v1035 = vld [vmem:[%s5] sm:$0xf]
  %v1036 = vld [vmem:[%s5 + $0x4] sm:$0xf]
  %v1037 = vld [vmem:[%s5 + $0x8] sm:$0xf]
  %v1038 = vld [vmem:[%s5 + $0xc] sm:$0xf]
  %v1039 = vld [vmem:[%s5 + $0x10] sm:$0xf]
  %v1040 = vld [vmem:[%s5 + $0x14] sm:$0xf]
  %v1041 = vld [vmem:[%s5 + $0x18] sm:$0xf]
  %v1042 = vld [vmem:[%s5 + $0x1c] sm:$0xf]
  %v1043 = vld [vmem:[%s5 + $0x20] sm:$0xf]
  %v1044 = vld [vmem:[%s5 + $0x24] sm:$0xf]
  %v1045 = vld [vmem:[%s5 + $0x28] sm:$0xf]
  %v1046 = vld [vmem:[%s5 + $0x2c] sm:$0xf]
  %v1047 = vld [vmem:[%s5 + $0x30] sm:$0xf]
  %v1048 = vld [vmem:[%s5 + $0x34] sm:$0xf]
  %v1049 = vld [vmem:[%s5 + $0x38] sm:$0xf]
  %v1050 = vld [vmem:[%s5 + $0x3c] sm:$0xf]
  %v1067 = vunpack.c.l.b16 %v1035
  %v1068 = vunpack.c.l.b16 %v1036
  %v1069 = vunpack.c.l.b16 %v1037
  %v1070 = vunpack.c.l.b16 %v1038
  %v1071 = vunpack.c.l.b16 %v1039
  %v1072 = vunpack.c.l.b16 %v1040
  %v1073 = vunpack.c.l.b16 %v1041
  %v1074 = vunpack.c.l.b16 %v1042
  %v1075 = vunpack.c.l.b16 %v1043
  %v1076 = vunpack.c.l.b16 %v1044
  %v1077 = vunpack.c.l.b16 %v1045
  %v1078 = vunpack.c.l.b16 %v1046
  %v1079 = vunpack.c.l.b16 %v1047
  %v1080 = vunpack.c.l.b16 %v1048
  %v1081 = vunpack.c.l.b16 %v1049
  %v1082 = vunpack.c.l.b16 %v1050
  %v1083 = vpack.c.b16 %v1068, %v1067
  %v1084 = vpack.c.b16 %v1070, %v1069
  %v1085 = vpack.c.b16 %v1072, %v1071
  %v1086 = vpack.c.b16 %v1074, %v1073
  %v1087 = vpack.c.b16 %v1076, %v1075
  %v1088 = vpack.c.b16 %v1078, %v1077
  %v1089 = vpack.c.b16 %v1080, %v1079
  %v1090 = vpack.c.b16 %v1082, %v1081
  %1099 = vmatpush.bf16.msra.mxu0 %v1090
  %1100 = vmatpush.bf16.msra.mxu0 %v1089
  %1101 = vmatpush.bf16.msra.mxu0 %v1088
  %1102 = vmatpush.bf16.msra.mxu0 %v1087
  %1103 = vmatpush.bf16.msra.mxu0 %v1086
  %1104 = vmatpush.bf16.msra.mxu0 %v1085
  %1105 = vmatpush.bf16.msra.mxu0 %v1084
  %1106 = vmatpush.bf16.msra.mxu0 %v1083
  %1107 = vmatmul.bf16.gmra.mxu0 %v867
  %v1108 = vpop.f32.mrf.mxu0
  %v1109 = vadd.f32 0.0, %v1108
  %v1110 = vpop.f32.mrf.mxu0
  %v1111 = vadd.f32 0.0, %v1110
  %1112 = vmatmul.bf16.gmra.mxu0 %v868
  %v1113 = vpop.f32.mrf.mxu0
  %v1114 = vadd.f32 0.0, %v1113
  %v1115 = vpop.f32.mrf.mxu0
  %v1116 = vadd.f32 0.0, %v1115
  %1117 = vmatmul.bf16.gmra.mxu0 %v869
  %v1118 = vpop.f32.mrf.mxu0
  %v1119 = vadd.f32 0.0, %v1118
  %v1120 = vpop.f32.mrf.mxu0
  %v1121 = vadd.f32 0.0, %v1120
  %1122 = vmatmul.bf16.gmra.mxu0 %v870
  %v1123 = vpop.f32.mrf.mxu0
  %v1124 = vadd.f32 0.0, %v1123
  %v1125 = vpop.f32.mrf.mxu0
  %v1126 = vadd.f32 0.0, %v1125
  %1127 = vdwg.mxu0
  %vm1128 = vcmask 64512
  %v1129 = vsel %vm1128, %v1016, -inf
  %v1130 = vsel %vm1128, %v1018, -inf
  %v1131 = vsel %vm1128, %v1021, -inf
  %v1132 = vsel %vm1128, %v1023, -inf
  %v1133 = vsel %vm1128, %v1026, -inf
  %v1134 = vmax.f32 %v1129, %v1133
  %v1135 = vsel %vm1128, %v1028, -inf
  %v1136 = vmax.f32 %v1130, %v1135
  %v1137 = vsel %vm1128, %v1031, -inf
  %v1138 = vmax.f32 %v1131, %v1137
  %v1139 = vsel %vm1128, %v1033, -inf
  %v1140 = vmax.f32 %v1132, %v1139
  %v1141 = vmax.f32 %v1134, %v1136
  %v1142 = vmax.f32 %v1138, %v1140
  %v1143 = vmax.f32 %v1141, %v1142
  %v1144 = vrot.slane %v1143, 4
  %v1145 = vmax.f32 %v1143, %v1144
  %v1146 = vrot.slane %v1145, 2
  %v1147 = vmax.f32 %v1145, %v1146
  %v1148 = vrot.slane %v1147, 1
  %v1149 = vmax.f32 %v1147, %v1148
  %v1150 = vsub.f32 %v1016, %v1149
  %v1151 = vsub.f32 %v1018, %v1149
  %v1152 = vsub.f32 %v1021, %v1149
  %v1153 = vsub.f32 %v1023, %v1149
  %v1154 = vsub.f32 %v1026, %v1149
  %v1155 = vsub.f32 %v1028, %v1149
  %v1156 = vsub.f32 %v1031, %v1149
  %v1157 = vsub.f32 %v1033, %v1149
  %v1158 = vmul.f32 %v1150, 1.442695
  %v1159 = vpow.pop %v1158
  %v1160 = vmul.f32 %v1151, 1.442695
  %v1161 = vpow.pop %v1160
  %v1162 = vmul.f32 %v1152, 1.442695
  %v1163 = vpow.pop %v1162
  %v1164 = vmul.f32 %v1153, 1.442695
  %v1165 = vpow.pop %v1164
  %v1166 = vmul.f32 %v1154, 1.442695
  %v1167 = vpow.pop %v1166
  %v1168 = vmul.f32 %v1155, 1.442695
  %v1169 = vpow.pop %v1168
  %v1170 = vmul.f32 %v1156, 1.442695
  %v1171 = vpow.pop %v1170
  %v1172 = vmul.f32 %v1157, 1.442695
  %v1173 = vpow.pop %v1172
  %1182 = vrot.lane.b32.xlu0 %v1159, 8
  %v1183 = vpop.permute.xlu0 %1182
  %1184 = vrot.lane.b32.xlu0 %v1161, 8
  %v1185 = vpop.permute.xlu0 %1184
  %1186 = vrot.lane.b32.xlu0 %v1163, 8
  %v1187 = vpop.permute.xlu0 %1186
  %1188 = vrot.lane.b32.xlu0 %v1165, 8
  %v1189 = vpop.permute.xlu0 %1188
  %1190 = vrot.lane.b32.xlu0 %v1167, 8
  %v1191 = vpop.permute.xlu0 %1190
  %1192 = vrot.lane.b32.xlu0 %v1169, 8
  %v1193 = vpop.permute.xlu0 %1192
  %1194 = vrot.lane.b32.xlu0 %v1171, 8
  %v1195 = vpop.permute.xlu0 %1194
  %1196 = vrot.lane.b32.xlu0 %v1173, 8
  %v1197 = vpop.permute.xlu0 %1196
  %1206 = vrot.lane.b32.xlu0 %v1159, 16
  %v1207 = vpop.permute.xlu0 %1206
  %1208 = vrot.lane.b32.xlu0 %v1161, 16
  %v1209 = vpop.permute.xlu0 %1208
  %1210 = vrot.lane.b32.xlu0 %v1163, 16
  %v1211 = vpop.permute.xlu0 %1210
  %1212 = vrot.lane.b32.xlu0 %v1165, 16
  %v1213 = vpop.permute.xlu0 %1212
  %1214 = vrot.lane.b32.xlu0 %v1167, 16
  %v1215 = vpop.permute.xlu0 %1214
  %1216 = vrot.lane.b32.xlu0 %v1169, 16
  %v1217 = vpop.permute.xlu0 %1216
  %1218 = vrot.lane.b32.xlu0 %v1171, 16
  %v1219 = vpop.permute.xlu0 %1218
  %1220 = vrot.lane.b32.xlu0 %v1173, 16
  %v1221 = vpop.permute.xlu0 %1220
  %1230 = vrot.lane.b32.xlu0 %v1159, 24
  %v1231 = vpop.permute.xlu0 %1230
  %1232 = vrot.lane.b32.xlu0 %v1161, 24
  %v1233 = vpop.permute.xlu0 %1232
  %1234 = vrot.lane.b32.xlu0 %v1163, 24
  %v1235 = vpop.permute.xlu0 %1234
  %1236 = vrot.lane.b32.xlu0 %v1165, 24
  %v1237 = vpop.permute.xlu0 %1236
  %1238 = vrot.lane.b32.xlu0 %v1167, 24
  %v1239 = vpop.permute.xlu0 %1238
  %1240 = vrot.lane.b32.xlu0 %v1169, 24
  %v1241 = vpop.permute.xlu0 %1240
  %1242 = vrot.lane.b32.xlu0 %v1171, 24
  %v1243 = vpop.permute.xlu0 %1242
  %1244 = vrot.lane.b32.xlu0 %v1173, 24
  %v1245 = vpop.permute.xlu0 %1244
  %v1254 = vsel %vm1128, %v1159, %v1183
  %v1255 = vsel %vm1128, %v1161, %v1185
  %v1256 = vsel %vm1128, %v1163, %v1187
  %v1257 = vsel %vm1128, %v1165, %v1189
  %v1258 = vsel %vm1128, %v1167, %v1191
  %v1259 = vsel %vm1128, %v1169, %v1193
  %v1260 = vsel %vm1128, %v1171, %v1195
  %v1261 = vsel %vm1128, %v1173, %v1197
  %vm1262 = vcmask 130048
  %v1263 = vsel %vm1262, %v1254, %v1207
  %v1264 = vsel %vm1262, %v1255, %v1209
  %v1265 = vsel %vm1262, %v1256, %v1211
  %v1266 = vsel %vm1262, %v1257, %v1213
  %v1267 = vsel %vm1262, %v1258, %v1215
  %v1268 = vsel %vm1262, %v1259, %v1217
  %v1269 = vsel %vm1262, %v1260, %v1219
  %v1270 = vsel %vm1262, %v1261, %v1221
  %vm1271 = vcmask 195584
  %v1272 = vsel %vm1271, %v1263, %v1231
  %v1273 = vsel %vm1271, %v1264, %v1233
  %v1274 = vsel %vm1271, %v1265, %v1235
  %v1275 = vsel %vm1271, %v1266, %v1237
  %v1276 = vsel %vm1271, %v1267, %v1239
  %v1277 = vsel %vm1271, %v1268, %v1241
  %v1278 = vsel %vm1271, %v1269, %v1243
  %v1279 = vsel %vm1271, %v1270, %v1245
  %v1280 = vld [vmem:[%s6] sm:$0x3]
  %v1281 = vmul.f32 %v1272, %v1109
  %v1282 = vmul.f32 %v1273, %v1111
  %v1283 = vmul.f32 %v1274, %v1114
  %v1284 = vmul.f32 %v1275, %v1116
  %v1285 = vmul.f32 %v1276, %v1119
  %v1286 = vmul.f32 %v1277, %v1121
  %v1287 = vmul.f32 %v1278, %v1124
  %v1288 = vmul.f32 %v1279, %v1126
  %vm1289 = vcmask 523264
  %v1291 = vsel %vm1289, %v1280, 0
  %1293 = vmatpush.msra.mxu0 0.0
  %1294 = vmatpush.msra.mxu0 0.0
  %1295 = vmatpush.msra.mxu0 0.0
  %1296 = vmatpush.msra.mxu0 0.0
  %1297 = vmatpush.msra.mxu0 0.0
  %1298 = vmatpush.msra.mxu0 0.0
  %1299 = vmatpush.msra.mxu0 0.0
  %1300 = vmatpush.msra.mxu0 0.0
  %1301 = vmatpush.msra.mxu0 %v1288
  %1302 = vmatpush.msra.mxu0 %v1287
  %1303 = vmatpush.msra.mxu0 %v1286
  %1304 = vmatpush.msra.mxu0 %v1285
  %1305 = vmatpush.msra.mxu0 %v1284
  %1306 = vmatpush.msra.mxu0 %v1283
  %1307 = vmatpush.msra.mxu0 %v1282
  %1308 = vmatpush.msra.mxu0 %v1281
  %1309 = vmatmul.f32.gmra.mxu0 %v1291
  %v1310 = vpop.f32.mrf.mxu0
  %v1311 = vadd.f32 0.0, %v1310
  %1312 = vdwg.mxu0
  %1313 = vmatpush.msra.mxu0 0.0
  %1314 = vmatpush.msra.mxu0 0.0
  %1315 = vmatpush.msra.mxu0 0.0
  %1316 = vmatpush.msra.mxu0 0.0
  %1317 = vmatpush.msra.mxu0 0.0
  %1318 = vmatpush.msra.mxu0 0.0
  %1319 = vmatpush.msra.mxu0 0.0
  %1320 = vmatpush.msra.mxu0 0.0
  %1321 = vmatpush.msra.mxu0 %v1173
  %1322 = vmatpush.msra.mxu0 %v1171
  %1323 = vmatpush.msra.mxu0 %v1169
  %1324 = vmatpush.msra.mxu0 %v1167
  %1325 = vmatpush.msra.mxu0 %v1165
  %1326 = vmatpush.msra.mxu0 %v1163
  %1327 = vmatpush.msra.mxu0 %v1161
  %1328 = vmatpush.msra.mxu0 %v1159
  %1329 = vmatmul.f32.gmra.mxu0 %v1291
  %v1330 = vpop.f32.mrf.mxu0
  %v1331 = vadd.f32 0.0, %v1330
  %1332 = vdwg.mxu0
  %1334 = vrot.lane.b32.xlu0 %v1331, 8
  %v1335 = vpop.permute.xlu0 %1334
  %1337 = vrot.lane.b32.xlu0 %v1331, 16
  %v1338 = vpop.permute.xlu0 %1337
  %1340 = vrot.lane.b32.xlu0 %v1331, 24
  %v1341 = vpop.permute.xlu0 %1340
  %v1343 = vsel %vm1128, %v1331, %v1335
  %v1344 = vsel %vm1262, %v1343, %v1338
  %v1345 = vsel %vm1271, %v1344, %v1341
  %v1346 = vrcp.pop %v1345
  %v1347 = vmul.f32 %v1345, %v1346
  %v1348 = vsub.f32 1.0, %v1347
  %v1349 = vmul.f32 %v1346, %v1348
  %v1350 = vadd.f32 %v1346, %v1349
  %vm1351 = vweird.f32 %v1345
  %vm1352 = vweird.f32 %v1346
  %vm1353 = vmor %vm1351, %vm1352
  %v1354 = vsel %vm1353, %v1346, %v1350
  %v1355 = vand.u32 2147483647, %v1345
  %vm1356 = vcmp.eq.f32.partialorder %v1355, 8.507059e+37
  %v1357 = vand.u32 %v1345, 2147483648
  %v1358 = vor.u32 1.1754944e-38, %v1357
  %v1359 = vsel %vm1356, %v1358, %v1354
  %v1360 = vmul.f32 %v1311, %v1359
  %vm1361 = vcmask 1041408
  %v1362 = vsel %vm1361, %v1360, 0.0
  %v1363 = vld [vmem:[%s7] sm:$0xff]
  %v1364 = vld [vmem:[%s7 + $0x8] sm:$0xff]
  %v1365 = vld [vmem:[%s7 + $0x10] sm:$0xff]
  %v1366 = vld [vmem:[%s7 + $0x18] sm:$0xff]
  %v1367 = vperm.slane %v36, 0
  %v1369 = vsel %vm107, %v1362, 0
  %1371 = vmatpush.msra.mxu0 0.0
  %1372 = vmatpush.msra.mxu0 0.0
  %1373 = vmatpush.msra.mxu0 0.0
  %1374 = vmatpush.msra.mxu0 0.0
  %1375 = vmatpush.msra.mxu0 0.0
  %1376 = vmatpush.msra.mxu0 0.0
  %1377 = vmatpush.msra.mxu0 0.0
  %1378 = vmatpush.msra.mxu0 0.0
  %1379 = vmatpush.msra.mxu0 0.0
  %1380 = vmatpush.msra.mxu0 0.0
  %1381 = vmatpush.msra.mxu0 0.0
  %1382 = vmatpush.msra.mxu0 0.0
  %1383 = vmatpush.msra.mxu0 %v1366
  %1384 = vmatpush.msra.mxu0 %v1365
  %1385 = vmatpush.msra.mxu0 %v1364
  %1386 = vmatpush.msra.mxu0 %v1363
  %1387 = vmatmul.f32.gmra.mxu0 %v1369
  %v1388 = vpop.f32.mrf.mxu0
  %v1389 = vadd.f32 %v1367, %v1388
  %1390 = vdwg.mxu0
  %1391 = vst [vmem:[%s9] sm:$0xff] %v1389
  // Predicated region
  $region38: #{embedding_cnn_attention.1} parent=0 // pred_check
    _
  $region39: #{embedding_cnn_attention.1} parent=0 // pred_check_branch
    %1393 = sbr.rel (0) target = $region41
  $region40: #{embedding_cnn_attention.1} parent=0 // pred_region
    _
  $region41: #{embedding_cnn_attention.1} parent=0 // pred_fallthru
    _
  // Predicated region
  $region42: #{embedding_cnn_attention.1} parent=0 // pred_check
    _
  $region43: #{embedding_cnn_attention.1} parent=0 // pred_check_branch
    %1395 = sbr.rel (0) target = $region45
  $region44: #{embedding_cnn_attention.1} parent=0 // pred_region
    _
  $region45: #{embedding_cnn_attention.1} parent=0 // pred_fallthru
    _

</llo_original>
